<compile_context>
chip_gen: v7x
topology: tpu7x:2x2x1
jax: 0.10.0
libtpu: 0.0.40
codegen_flags: <defaults>
</compile_context>

<pallas_src>
import functools

import numpy as np
import jax
import jax.numpy as jnp
from jax.experimental import pallas as pl
from jax.experimental.pallas import tpu as pltpu


# ----------------------------------------------------------------------------
# Pallas kernel: fused fc1+relu -> fc2+relu -> tconv1(as matmul)+relu ->
#                tconv2(as matmul) -> optional sigmoid.
# ----------------------------------------------------------------------------
def _conv_decoder_kernel(x_ref, w1_ref, b1_ref, w2_ref, b2_ref,
                         m1_ref, c1_ref, m2_ref, c2_ref, o_ref,
                         *, apply_sigmoid):
    h1 = jnp.dot(x_ref[...], w1_ref[...],
                 preferred_element_type=jnp.float32) + b1_ref[...]
    h1 = jnp.maximum(h1, 0.0)

    h2 = jnp.dot(h1, w2_ref[...],
                 preferred_element_type=jnp.float32) + b2_ref[...]
    h2 = jnp.maximum(h2, 0.0)

    # tconv1 as a dense matmul over the flattened (Cin*W0) activations.
    t1 = jnp.dot(h2, m1_ref[...],
                 preferred_element_type=jnp.float32) + c1_ref[...]
    t1 = jnp.maximum(t1, 0.0)

    # tconv2 as a dense matmul over the flattened (Cout1*Wout1) activations.
    dec = jnp.dot(t1, m2_ref[...],
                  preferred_element_type=jnp.float32) + c2_ref[...]

    if apply_sigmoid:
        dec = 1.0 / (1.0 + jnp.exp(-dec))

    o_ref[...] = dec.astype(o_ref.dtype)


# ----------------------------------------------------------------------------
# Host-side (jnp) construction of the transposed-conv linear maps.
# ----------------------------------------------------------------------------
def _tconv1_as_matrix(w, w_in, stride, out_pad):
    """w: [Cin, Cout, K] -> M: [Cin*w_in, Cout*w_out]; w_out=(w_in-1)*s+K+out_pad.

    out[b, co, s*x + k] += in[b, ci, x] * w[ci, co, k]   (height-1 tconv).
    """
    cin, cout, k = w.shape
    w_out = (w_in - 1) * stride + k + out_pad
    ci = jnp.arange(cin)[:, None, None, None]
    xw = jnp.arange(w_in)[None, :, None, None]
    co = jnp.arange(cout)[None, None, :, None]
    kk = jnp.arange(k)[None, None, None, :]
    shape = (cin, w_in, cout, k)
    rows = jnp.broadcast_to(ci * w_in + xw, shape).reshape(-1)
    cols = jnp.broadcast_to(co * w_out + stride * xw + kk, shape).reshape(-1)
    vals = jnp.broadcast_to(w[:, None, :, :], shape).reshape(-1).astype(jnp.float32)
    m = jnp.zeros((cin * w_in, cout * w_out), jnp.float32)
    return m.at[rows, cols].add(vals)


def _tconv2_as_matrix(w, w_in):
    """w: [Cin, KH, KW] -> M: [Cin*w_in, KH*w_out]; w_out = w_in + KW - 1.

    out[b, ky, x + kx] += in[b, ci, x] * w[ci, ky, kx]   (height-1 -> KH tconv,
    single output channel, stride 1).
    """
    cin, kh, kw = w.shape
    w_out = w_in + kw - 1
    ci = jnp.arange(cin)[:, None, None, None]
    xw = jnp.arange(w_in)[None, :, None, None]
    ky = jnp.arange(kh)[None, None, :, None]
    kx = jnp.arange(kw)[None, None, None, :]
    shape = (cin, w_in, kh, kw)
    rows = jnp.broadcast_to(ci * w_in + xw, shape).reshape(-1)
    cols = jnp.broadcast_to(ky * w_out + xw + kx, shape).reshape(-1)
    vals = jnp.broadcast_to(w[:, None, :, :], shape).reshape(-1).astype(jnp.float32)
    m = jnp.zeros((cin * w_in, kh * w_out), jnp.float32)
    return m.at[rows, cols].add(vals)


# ----------------------------------------------------------------------------
# Forward wrapper.
# ----------------------------------------------------------------------------
@functools.partial(jax.jit, static_argnames=("apply_sigmoid",))
def conv_decoder_forward(enc, params, *, apply_sigmoid=False):
    """Pallas forward for ConvDecoder.

    params = (w_fc1[D,2D], b_fc1[2D], w_fc2[2D,4D], b_fc2[4D],
              w_t1[Cin,Cout1,4]  (torch (Cin,Cout1,1,4) squeezed),
              b_t1[Cout1],
              w_t2[Cout1,H,2]    (torch (Cout1,1,H,2) squeezed),
              b_t2[1])
    Returns dec of shape [B, 1, H, Wout2].
    """
    w_fc1, b_fc1, w_fc2, b_fc2, w_t1, b_t1, w_t2, b_t2 = params
    bsz = enc.shape[0]
    cin, cout1, kw1 = w_t1.shape
    _, h, kw2 = w_t2.shape
    w0 = w_fc2.shape[1] // cin                    # width after the .view()
    stride1, outpad1 = 2, 1                       # from the module spec
    wout1 = (w0 - 1) * stride1 + kw1 + outpad1    # tconv1 output width
    wout2 = wout1 + kw2 - 1                       # tconv2 output width

    m1 = _tconv1_as_matrix(w_t1, w0, stride1, outpad1)      # [cin*w0, cout1*wout1]
    c1 = jnp.repeat(b_t1.astype(jnp.float32), wout1)[None, :]
    m2 = _tconv2_as_matrix(w_t2, wout1)                     # [cout1*wout1, h*wout2]
    c2 = jnp.full((1, h * wout2), b_t2[0], jnp.float32)

    kernel = functools.partial(_conv_decoder_kernel, apply_sigmoid=apply_sigmoid)
    out_flat = pl.pallas_call(
        kernel,
        out_shape=jax.ShapeDtypeStruct((bsz, h * wout2), jnp.float32),
        in_specs=[pl.BlockSpec(memory_space=pltpu.VMEM)] * 9,
        out_specs=pl.BlockSpec(memory_space=pltpu.VMEM),
    )(enc.astype(jnp.float32),
      w_fc1.astype(jnp.float32), b_fc1.astype(jnp.float32)[None, :],
      w_fc2.astype(jnp.float32), b_fc2.astype(jnp.float32)[None, :],
      m1, c1, m2, c2)

    return out_flat.reshape(bsz, 1, h, wout2)


# ----------------------------------------------------------------------------
# Independent (definitional) numpy reference of the PyTorch forward.
# ----------------------------------------------------------------------------
def _reference_forward(enc, params, apply_sigmoid):
    (w_fc1, b_fc1, w_fc2, b_fc2,
     w_t1, b_t1, w_t2, b_t2) = (np.asarray(p, np.float64) for p in params)
    x = np.asarray(enc, np.float64)
    h1 = np.maximum(x @ w_fc1 + b_fc1, 0.0)
    h2 = np.maximum(h1 @ w_fc2 + b_fc2, 0.0)
    bsz = x.shape[0]
    cin, cout1, kw1 = w_t1.shape
    _, hh, kw2 = w_t2.shape
    w0 = h2.shape[1] // cin
    v = h2.reshape(bsz, cin, w0)

    wout1 = (w0 - 1) * 2 + kw1 + 1          # stride 2, output_padding 1
    out1 = np.zeros((bsz, cout1, wout1))
    for b in range(bsz):
        for ci in range(cin):
            for co in range(cout1):
                for w in range(w0):
                    for k in range(kw1):
                        out1[b, co, 2 * w + k] += v[b, ci, w] * w_t1[ci, co, k]
    out1 = np.maximum(out1 + b_t1[None, :, None], 0.0)

    wout2 = wout1 + kw2 - 1
    out2 = np.zeros((bsz, hh, wout2))
    for b in range(bsz):
        for c1 in range(cout1):
            for xw in range(wout1):
                for ky in range(hh):
                    for kx in range(kw2):
                        out2[b, ky, xw + kx] += out1[b, c1, xw] * w_t2[c1, ky, kx]
    out2 += b_t2[0]
    if apply_sigmoid:
        out2 = 1.0 / (1.0 + np.exp(-out2))
    return out2.reshape(bsz, 1, hh, wout2).astype(np.float32)


if __name__ == "__main__":
    key = jax.random.PRNGKey(0)
    ks = jax.random.split(key, 9)

    # Small config consistent with the module: input_dim=32, channels=(4, 8),
    # output_dim=(1, 16, 68), apply_sigmoid=True.
    B, INPUT_DIM = 2, 32
    CIN, COUT1 = 4, 8
    H = 16
    APPLY_SIGMOID = True

    W0 = 4 * INPUT_DIM // CIN        # 32  (width after .view)
    WOUT1 = (W0 - 1) * 2 + 4 + 1     # 67  (tconv1 out width)
    WOUT2 = WOUT1 + 2 - 1            # 68  (tconv2 out width)

    s = 0.1
    enc   = jax.random.normal(ks[0], (B, INPUT_DIM), jnp.float32)
    w_fc1 = s * jax.random.normal(ks[1], (INPUT_DIM, 2 * INPUT_DIM), jnp.float32)
    b_fc1 = s * jax.random.normal(ks[2], (2 * INPUT_DIM,), jnp.float32)
    w_fc2 = s * jax.random.normal(ks[3], (2 * INPUT_DIM, 4 * INPUT_DIM), jnp.float32)
    b_fc2 = s * jax.random.normal(ks[4], (4 * INPUT_DIM,), jnp.float32)
    w_t1  = s * jax.random.normal(ks[5], (CIN, COUT1, 4), jnp.float32)   # (Cin,Cout,1,4) squeezed
    b_t1  = s * jax.random.normal(ks[6], (COUT1,), jnp.float32)
    w_t2  = s * jax.random.normal(ks[7], (COUT1, H, 2), jnp.float32)     # (Cout1,1,H,2) squeezed
    b_t2  = s * jax.random.normal(ks[8], (1,), jnp.float32)

    params = (w_fc1, b_fc1, w_fc2, b_fc2, w_t1, b_t1, w_t2, b_t2)

    y = conv_decoder_forward(enc, params, apply_sigmoid=APPLY_SIGMOID)
    jax.block_until_ready(y)

    ref = _reference_forward(enc, params, APPLY_SIGMOID)
    assert y.shape == (B, 1, H, WOUT2), y.shape
    np.testing.assert_allclose(np.asarray(y), ref, rtol=2e-2, atol=2e-2)

    print("KERNEL_OK")
</pallas_src>

<mosaic_0001>
module attributes {stable_mosaic.version = 11 : i64} {
  func.func private @main(%arg0: i32) attributes {dimension_semantics = [#tpu.dimension_semantics<core_parallel>], iteration_bounds = array<i64: 2>, tpu.core_type = #tpu.core_type<sc_scalar_subcore>, window_params = []} {
    return
  }
}

module attributes {stable_mosaic.version = 11 : i64} {
  func.func private @main(%arg0: i32) attributes {dimension_semantics = [#tpu.dimension_semantics<core_parallel>], iteration_bounds = array<i64: 2>, tpu.core_type = #tpu.core_type<sc_scalar_subcore>, window_params = []} {
    return
  }
}

module attributes {stable_mosaic.version = 11 : i64} {
  func.func @_conv_decoder_kernel(%arg0: memref<2x32xf32, #tpu.memory_space<vmem>>, %arg1: memref<32x64xf32, #tpu.memory_space<vmem>>, %arg2: memref<1x64xf32, #tpu.memory_space<vmem>>, %arg3: memref<64x128xf32, #tpu.memory_space<vmem>>, %arg4: memref<1x128xf32, #tpu.memory_space<vmem>>, %arg5: memref<128x536xf32, #tpu.memory_space<vmem>>, %arg6: memref<1x536xf32, #tpu.memory_space<vmem>>, %arg7: memref<536x1088xf32, #tpu.memory_space<vmem>>, %arg8: memref<1x1088xf32, #tpu.memory_space<vmem>>, %arg9: memref<2x1088xf32, #tpu.memory_space<vmem>>) attributes {dimension_semantics = [], scalar_prefetch = 0 : i64, scratch_operands = 0 : i64, tpu.core_type = #tpu.core_type<tc>} {
    %c0 = arith.constant 0 : index
    %c0_0 = arith.constant 0 : index
    %0 = vector.load %arg0[%c0, %c0_0] : memref<2x32xf32, #tpu.memory_space<vmem>>, vector<2x32xf32>
    %c0_1 = arith.constant 0 : index
    %c0_2 = arith.constant 0 : index
    %1 = vector.load %arg1[%c0_1, %c0_2] : memref<32x64xf32, #tpu.memory_space<vmem>>, vector<32x64xf32>
    %cst = arith.constant dense<0.000000e+00> : vector<2x64xf32>
    %2 = tpu.matmul %0, %1, %cst {dimension_numbers = #tpu.dot_dimension_numbers<[1], [0], [0], [1], [0, 0, 1, 1], [], []>} : vector<2x32xf32>, vector<32x64xf32>, vector<2x64xf32> -> vector<2x64xf32>
    %c0_3 = arith.constant 0 : index
    %c0_4 = arith.constant 0 : index
    %3 = vector.load %arg2[%c0_3, %c0_4] : memref<1x64xf32, #tpu.memory_space<vmem>>, vector<1x64xf32>
    %4 = vector.broadcast %3 : vector<1x64xf32> to vector<2x64xf32>
    %5 = arith.addf %2, %4 : vector<2x64xf32>
    %cst_5 = arith.constant 0.000000e+00 : f32
    %6 = vector.broadcast %cst_5 : f32 to vector<2x64xf32>
    %7 = arith.maximumf %5, %6 : vector<2x64xf32>
    %c0_6 = arith.constant 0 : index
    %c0_7 = arith.constant 0 : index
    %8 = vector.load %arg3[%c0_6, %c0_7] : memref<64x128xf32, #tpu.memory_space<vmem>>, vector<64x128xf32>
    %cst_8 = arith.constant dense<0.000000e+00> : vector<2x128xf32>
    %9 = tpu.matmul %7, %8, %cst_8 {dimension_numbers = #tpu.dot_dimension_numbers<[1], [0], [0], [1], [0, 0, 1, 1], [], []>} : vector<2x64xf32>, vector<64x128xf32>, vector<2x128xf32> -> vector<2x128xf32>
    %c0_9 = arith.constant 0 : index
    %c0_10 = arith.constant 0 : index
    %10 = vector.load %arg4[%c0_9, %c0_10] : memref<1x128xf32, #tpu.memory_space<vmem>>, vector<1x128xf32>
    %11 = vector.broadcast %10 : vector<1x128xf32> to vector<2x128xf32>
    %12 = arith.addf %9, %11 : vector<2x128xf32>
    %cst_11 = arith.constant 0.000000e+00 : f32
    %13 = vector.broadcast %cst_11 : f32 to vector<2x128xf32>
    %14 = arith.maximumf %12, %13 : vector<2x128xf32>
    %c0_12 = arith.constant 0 : index
    %c0_13 = arith.constant 0 : index
    %15 = vector.load %arg5[%c0_12, %c0_13] : memref<128x536xf32, #tpu.memory_space<vmem>>, vector<128x536xf32>
    %cst_14 = arith.constant dense<0.000000e+00> : vector<2x536xf32>
    %16 = tpu.matmul %14, %15, %cst_14 {dimension_numbers = #tpu.dot_dimension_numbers<[1], [0], [0], [1], [0, 0, 1, 1], [], []>} : vector<2x128xf32>, vector<128x536xf32>, vector<2x536xf32> -> vector<2x536xf32>
    %c0_15 = arith.constant 0 : index
    %c0_16 = arith.constant 0 : index
    %17 = vector.load %arg6[%c0_15, %c0_16] : memref<1x536xf32, #tpu.memory_space<vmem>>, vector<1x536xf32>
    %18 = vector.broadcast %17 : vector<1x536xf32> to vector<2x536xf32>
    %19 = arith.addf %16, %18 : vector<2x536xf32>
    %cst_17 = arith.constant 0.000000e+00 : f32
    %20 = vector.broadcast %cst_17 : f32 to vector<2x536xf32>
    %21 = arith.maximumf %19, %20 : vector<2x536xf32>
    %c0_18 = arith.constant 0 : index
    %c0_19 = arith.constant 0 : index
    %22 = vector.load %arg7[%c0_18, %c0_19] : memref<536x1088xf32, #tpu.memory_space<vmem>>, vector<536x1088xf32>
    %cst_20 = arith.constant dense<0.000000e+00> : vector<2x1088xf32>
    %23 = tpu.matmul %21, %22, %cst_20 {dimension_numbers = #tpu.dot_dimension_numbers<[1], [0], [0], [1], [0, 0, 1, 1], [], []>} : vector<2x536xf32>, vector<536x1088xf32>, vector<2x1088xf32> -> vector<2x1088xf32>
    %c0_21 = arith.constant 0 : index
    %c0_22 = arith.constant 0 : index
    %24 = vector.load %arg8[%c0_21, %c0_22] : memref<1x1088xf32, #tpu.memory_space<vmem>>, vector<1x1088xf32>
    %25 = vector.broadcast %24 : vector<1x1088xf32> to vector<2x1088xf32>
    %26 = arith.addf %23, %25 : vector<2x1088xf32>
    %cst_23 = arith.constant 0.000000e+00 : f32
    %27 = vector.broadcast %cst_23 : f32 to vector<2x1088xf32>
    %28 = arith.subf %27, %26 : vector<2x1088xf32>
    %29 = math.exp %28 : vector<2x1088xf32>
    %cst_24 = arith.constant 1.000000e+00 : f32
    %30 = vector.broadcast %cst_24 : f32 to vector<2x1088xf32>
    %31 = arith.addf %30, %29 : vector<2x1088xf32>
    %cst_25 = arith.constant 1.000000e+00 : f32
    %32 = vector.broadcast %cst_25 : f32 to vector<2x1088xf32>
    %33 = arith.divf %32, %31 : vector<2x1088xf32>
    %c0_26 = arith.constant 0 : index
    %c0_27 = arith.constant 0 : index
    %34 = vector.load %arg9[%c0_26, %c0_27] : memref<2x1088xf32, #tpu.memory_space<vmem>>, vector<2x1088xf32>
    tpu.vector_store %arg9[%c0_26, %c0_27], %33 {strides = array<i32>} : memref<2x1088xf32, #tpu.memory_space<vmem>>, vector<2x1088xf32>,
    return
  }
}

</mosaic_0001>

<llo_original>
// kernel: conv_decoder_forward.1
$region0: #{conv_decoder_forward.1}
  #allocation0 [shape = 'u32[]', space=smem, size = 0x4, offset = 0x4, fixed_abs, tag = 'smem constant byte address 0x4 - core index']
  #allocation1 [shape = 'u32[144,128]{1,0:T(1,128)}', space=vmem, size = 0x12000, scoped, tag = 'internal scratch']
  %s0 = inlined_call_operand.vmem [shape: f32[2,32], index: 0, kind: input, shape index: {}]
  %s1 = inlined_call_operand.vmem [shape: f32[32,64], index: 1, kind: input, shape index: {}]
  %s2 = inlined_call_operand.vmem [shape: f32[1,64], index: 2, kind: input, shape index: {}]
  %s3 = inlined_call_operand.vmem [shape: f32[64,128], index: 3, kind: input, shape index: {}]
  %s4 = inlined_call_operand.vmem [shape: f32[1,128], index: 4, kind: input, shape index: {}]
  %s5 = inlined_call_operand.vmem [shape: f32[128,536], index: 5, kind: input, shape index: {}]
  %s6 = inlined_call_operand.vmem [shape: f32[1,536], index: 6, kind: input, shape index: {}]
  %s7 = inlined_call_operand.vmem [shape: f32[536,1088], index: 7, kind: input, shape index: {}]
  %s8 = inlined_call_operand.vmem [shape: f32[1,1088], index: 8, kind: input, shape index: {}]
  %s9 = inlined_call_operand.vmem [shape: f32[2,1088], index: 9, kind: output, shape index: {}]
  %s10 = sld [smem:[#allocation0]]
  $region46: #{conv_decoder_forward.1} parent=0
    _
  %s12 = ssub.s32 1, %s10
  %s13 = scalar_select 0, %s12, %s10
  // Predicated region
  $region2: #{conv_decoder_forward.1} parent=0 // pred_check
    _
  $region3: #{conv_decoder_forward.1} parent=0 // pred_check_branch
    %15 = sbr.rel (0) target = $region5
  $region4: #{conv_decoder_forward.1} parent=0 // pred_region
    _
  $region5: #{conv_decoder_forward.1} parent=0 // pred_fallthru
    _
  // Predicated region
  $region6: #{conv_decoder_forward.1} parent=0 // pred_check
    _
  $region7: #{conv_decoder_forward.1} parent=0 // pred_check_branch
    %17 = sbr.rel (0) target = $region9
  $region8: #{conv_decoder_forward.1} parent=0 // pred_region
    _
  $region9: #{conv_decoder_forward.1} parent=0 // pred_fallthru
    _
  // Predicated region
  $region10: #{conv_decoder_forward.1} parent=0 // pred_check
    _
  $region11: #{conv_decoder_forward.1} parent=0 // pred_check_branch
    %19 = sbr.rel (0) target = $region13
  $region12: #{conv_decoder_forward.1} parent=0 // pred_region
    _
  $region13: #{conv_decoder_forward.1} parent=0 // pred_fallthru
    _
  // Predicated region
  $region14: #{conv_decoder_forward.1} parent=0 // pred_check
    _
  $region15: #{conv_decoder_forward.1} parent=0 // pred_check_branch
    %21 = sbr.rel (0) target = $region17
  $region16: #{conv_decoder_forward.1} parent=0 // pred_region
    _
  $region17: #{conv_decoder_forward.1} parent=0 // pred_fallthru
    _
  // Predicated region
  $region18: #{conv_decoder_forward.1} parent=0 // pred_check
    _
  $region19: #{conv_decoder_forward.1} parent=0 // pred_check_branch
    %23 = sbr.rel (0) target = $region21
  $region20: #{conv_decoder_forward.1} parent=0 // pred_region
    _
  $region21: #{conv_decoder_forward.1} parent=0 // pred_fallthru
    _
  // Predicated region
  $region22: #{conv_decoder_forward.1} parent=0 // pred_check
    _
  $region23: #{conv_decoder_forward.1} parent=0 // pred_check_branch
    %25 = sbr.rel (0) target = $region25
  $region24: #{conv_decoder_forward.1} parent=0 // pred_region
    _
  $region25: #{conv_decoder_forward.1} parent=0 // pred_fallthru
    _
  // Predicated region
  $region26: #{conv_decoder_forward.1} parent=0 // pred_check
    _
  $region27: #{conv_decoder_forward.1} parent=0 // pred_check_branch
    %27 = sbr.rel (0) target = $region29
  $region28: #{conv_decoder_forward.1} parent=0 // pred_region
    _
  $region29: #{conv_decoder_forward.1} parent=0 // pred_fallthru
    _
  // Predicated region
  $region30: #{conv_decoder_forward.1} parent=0 // pred_check
    _
  $region31: #{conv_decoder_forward.1} parent=0 // pred_check_branch
    %29 = sbr.rel (0) target = $region33
  $region32: #{conv_decoder_forward.1} parent=0 // pred_region
    _
  $region33: #{conv_decoder_forward.1} parent=0 // pred_fallthru
    _
  // Predicated region
  $region34: #{conv_decoder_forward.1} parent=0 // pred_check
    _
  $region35: #{conv_decoder_forward.1} parent=0 // pred_check_branch
    %31 = sbr.rel (0) target = $region37
  $region36: #{conv_decoder_forward.1} parent=0 // pred_region
    _
  $region37: #{conv_decoder_forward.1} parent=0 // pred_fallthru
    _
  %v32 = vld [vmem:[%s0] sm:$0x3]
  %v33 = vld [vmem:[%s1] sm:$0xff]
  %v34 = vld [vmem:[%s1 + $0x8] sm:$0xff]
  %v35 = vld [vmem:[%s1 + $0x10] sm:$0xff]
  %v36 = vld [vmem:[%s1 + $0x18] sm:$0xff]
  %v37 = vld [vmem:[%s2] sm:$0x1]
  %v39 = vlaneseq
  %v40 = vshrl.u32 %v39, 7
  %v41 = vsub.s32 0, %v40
  %v42 = vrot.slane %v37, %v41
  %vm44 = vcmask 261120
  %v46 = vsel %vm44, %v32, 0
  %48 = vmatprep.subr.mxu0 0.0
  %49 = vmatpush1.msra.mxu0 %v33
  %50 = vmatprep.subr.mxu0 0.0
  %51 = vmatpush1.msra.mxu0 %v34
  %52 = vmatprep.subr.mxu0 0.0
  %53 = vmatpush1.msra.mxu0 %v35
  %54 = vmatprep.subr.mxu0 0.0
  %55 = vmatpush1.msra.mxu0 %v36
  %56 = vmatprep.subr.mxu0 0.0
  %57 = vmatpush1.msra.mxu0 0.0
  %58 = vmatprep.subr.mxu0 0.0
  %59 = vmatpush1.msra.mxu0 0.0
  %60 = vmatprep.subr.mxu0 0.0
  %61 = vmatpush1.msra.mxu0 0.0
  %62 = vmatprep.subr.mxu0 0.0
  %63 = vmatpush1.msra.mxu0 0.0
  %64 = vmatprep.subr.mxu0 0.0
  %65 = vmatpush1.msra.mxu0 0.0
  %66 = vmatprep.subr.mxu0 0.0
  %67 = vmatpush1.msra.mxu0 0.0
  %68 = vmatprep.subr.mxu0 0.0
  %69 = vmatpush1.msra.mxu0 0.0
  %70 = vmatprep.subr.mxu0 0.0
  %71 = vmatpush1.msra.mxu0 0.0
  %72 = vmatprep.subr.mxu0 0.0
  %73 = vmatpush1.msra.mxu0 0.0
  %74 = vmatprep.subr.mxu0 0.0
  %75 = vmatpush1.msra.mxu0 0.0
  %76 = vmatprep.subr.mxu0 0.0
  %77 = vmatpush1.msra.mxu0 0.0
  %78 = vmatprep.subr.mxu0 0.0
  %79 = vmatpush1.msra.mxu0 0.0
  %80 = vmatprep.subr.mxu0 0.0
  %81 = vmatpush1.msra.mxu0 0.0
  %82 = vmatprep.subr.mxu0 0.0
  %83 = vmatpush1.msra.mxu0 0.0
  %84 = vmatprep.subr.mxu0 0.0
  %85 = vmatpush1.msra.mxu0 0.0
  %86 = vmatprep.subr.mxu0 0.0
  %87 = vmatpush1.msra.mxu0 0.0
  %88 = vmatprep.subr.mxu0 0.0
  %89 = vmatpush1.msra.mxu0 0.0
  %90 = vmatprep.subr.mxu0 0.0
  %91 = vmatpush1.msra.mxu0 0.0
  %92 = vmatprep.subr.mxu0 0.0
  %93 = vmatpush1.msra.mxu0 0.0
  %94 = vmatprep.subr.mxu0 0.0
  %95 = vmatpush1.msra.mxu0 0.0
  %96 = vmatprep.subr.mxu0 0.0
  %97 = vmatpush1.msra.mxu0 0.0
  %98 = vmatprep.subr.mxu0 0.0
  %99 = vmatpush1.msra.mxu0 0.0
  %100 = vmatprep.subr.mxu0 0.0
  %101 = vmatpush1.msra.mxu0 0.0
  %102 = vmatprep.subr.mxu0 0.0
  %103 = vmatpush1.msra.mxu0 0.0
  %104 = vmatprep.subr.mxu0 0.0
  %105 = vmatpush1.msra.mxu0 0.0
  %106 = vmatprep.subr.mxu0 0.0
  %107 = vmatpush1.msra.mxu0 0.0
  %108 = vmatprep.subr.mxu0 0.0
  %109 = vmatpush1.msra.mxu0 0.0
  %110 = vmatprep.subr.mxu0 0.0
  %111 = vmatpush1.msra.mxu0 0.0
  %112 = vmatprep.mubr.f32.mxu0 0.0
  %113 = vmatmul.mubr.f32.gmra.mrb[0].mxu0 %v46
  %v114 = vpop.f32.mrb[0].mxu0
  %v115 = vadd.f32 %v42, %v114
  %v116 = vpop.f32.mrb[0].mxu0
  %117 = vdwg.mxu0
  %v118 = vmax.f32 %v115, 0.0
  %v119 = vld [vmem:[%s3] sm:$0xff]
  %v120 = vld [vmem:[%s3 + $0x8] sm:$0xff]
  %v121 = vld [vmem:[%s3 + $0x10] sm:$0xff]
  %v122 = vld [vmem:[%s3 + $0x18] sm:$0xff]
  %v123 = vld [vmem:[%s3 + $0x20] sm:$0xff]
  %v124 = vld [vmem:[%s3 + $0x28] sm:$0xff]
  %v125 = vld [vmem:[%s3 + $0x30] sm:$0xff]
  %v126 = vld [vmem:[%s3 + $0x38] sm:$0xff]
  %v127 = vld [vmem:[%s4] sm:$0x1]
  %v129 = vlaneseq
  %v130 = vshrl.u32 %v129, 7
  %v131 = vsub.s32 0, %v130
  %v132 = vrot.slane %v127, %v131
  %vm134 = vcmask 523264
  %v136 = vsel %vm134, %v118, 0
  %138 = vmatprep.subr.mxu0 0.0
  %139 = vmatpush1.msra.mxu0 %v119
  %140 = vmatprep.subr.mxu0 0.0
  %141 = vmatpush1.msra.mxu0 %v120
  %142 = vmatprep.subr.mxu0 0.0
  %143 = vmatpush1.msra.mxu0 %v121
  %144 = vmatprep.subr.mxu0 0.0
  %145 = vmatpush1.msra.mxu0 %v122
  %146 = vmatprep.subr.mxu0 0.0
  %147 = vmatpush1.msra.mxu0 %v123
  %148 = vmatprep.subr.mxu0 0.0
  %149 = vmatpush1.msra.mxu0 %v124
  %150 = vmatprep.subr.mxu0 0.0
  %151 = vmatpush1.msra.mxu0 %v125
  %152 = vmatprep.subr.mxu0 0.0
  %153 = vmatpush1.msra.mxu0 %v126
  %154 = vmatprep.subr.mxu0 0.0
  %155 = vmatpush1.msra.mxu0 0.0
  %156 = vmatprep.subr.mxu0 0.0
  %157 = vmatpush1.msra.mxu0 0.0
  %158 = vmatprep.subr.mxu0 0.0
  %159 = vmatpush1.msra.mxu0 0.0
  %160 = vmatprep.subr.mxu0 0.0
  %161 = vmatpush1.msra.mxu0 0.0
  %162 = vmatprep.subr.mxu0 0.0
  %163 = vmatpush1.msra.mxu0 0.0
  %164 = vmatprep.subr.mxu0 0.0
  %165 = vmatpush1.msra.mxu0 0.0
  %166 = vmatprep.subr.mxu0 0.0
  %167 = vmatpush1.msra.mxu0 0.0
  %168 = vmatprep.subr.mxu0 0.0
  %169 = vmatpush1.msra.mxu0 0.0
  %170 = vmatprep.subr.mxu0 0.0
  %171 = vmatpush1.msra.mxu0 0.0
  %172 = vmatprep.subr.mxu0 0.0
  %173 = vmatpush1.msra.mxu0 0.0
  %174 = vmatprep.subr.mxu0 0.0
  %175 = vmatpush1.msra.mxu0 0.0
  %176 = vmatprep.subr.mxu0 0.0
  %177 = vmatpush1.msra.mxu0 0.0
  %178 = vmatprep.subr.mxu0 0.0
  %179 = vmatpush1.msra.mxu0 0.0
  %180 = vmatprep.subr.mxu0 0.0
  %181 = vmatpush1.msra.mxu0 0.0
  %182 = vmatprep.subr.mxu0 0.0
  %183 = vmatpush1.msra.mxu0 0.0
  %184 = vmatprep.subr.mxu0 0.0
  %185 = vmatpush1.msra.mxu0 0.0
  %186 = vmatprep.subr.mxu0 0.0
  %187 = vmatpush1.msra.mxu0 0.0
  %188 = vmatprep.subr.mxu0 0.0
  %189 = vmatpush1.msra.mxu0 0.0
  %190 = vmatprep.subr.mxu0 0.0
  %191 = vmatpush1.msra.mxu0 0.0
  %192 = vmatprep.subr.mxu0 0.0
  %193 = vmatpush1.msra.mxu0 0.0
  %194 = vmatprep.subr.mxu0 0.0
  %195 = vmatpush1.msra.mxu0 0.0
  %196 = vmatprep.subr.mxu0 0.0
  %197 = vmatpush1.msra.mxu0 0.0
  %198 = vmatprep.subr.mxu0 0.0
  %199 = vmatpush1.msra.mxu0 0.0
  %200 = vmatprep.subr.mxu0 0.0
  %201 = vmatpush1.msra.mxu0 0.0
  %202 = vmatprep.mubr.f32.mxu0 0.0
  %203 = vmatmul.mubr.f32.gmra.mrb[0].mxu0 %v136
  %v204 = vpop.f32.mrb[0].mxu0
  %v205 = vadd.f32 %v132, %v204
  %v206 = vpop.f32.mrb[0].mxu0
  %207 = vdwg.mxu0
  %v208 = vmax.f32 %v205, 0.0
  %v209 = vld [vmem:[%s5] sm:$0xff]
  %v210 = vld [vmem:[%s5 + $0x8] sm:$0xff]
  %v211 = vld [vmem:[%s5 + $0x10] sm:$0xff]
  %v212 = vld [vmem:[%s5 + $0x18] sm:$0xff]
  %v213 = vld [vmem:[%s5 + $0x20] sm:$0xff]
  %v214 = vld [vmem:[%s5 + $0x28] sm:$0xff]
  %v215 = vld [vmem:[%s5 + $0x30] sm:$0xff]
  %v216 = vld [vmem:[%s5 + $0x38] sm:$0xff]
  %v217 = vld [vmem:[%s5 + $0x40] sm:$0xff]
  %v218 = vld [vmem:[%s5 + $0x48] sm:$0xff]
  %v219 = vld [vmem:[%s5 + $0x50] sm:$0xff]
  %v220 = vld [vmem:[%s5 + $0x58] sm:$0xff]
  %v221 = vld [vmem:[%s5 + $0x60] sm:$0xff]
  %v222 = vld [vmem:[%s5 + $0x68] sm:$0xff]
  %v223 = vld [vmem:[%s5 + $0x70] sm:$0xff]
  %v224 = vld [vmem:[%s5 + $0x78] sm:$0xff]
  %v225 = vld [vmem:[%s5 + $0x80] sm:$0xff]
  %v226 = vld [vmem:[%s5 + $0x88] sm:$0xff]
  %v227 = vld [vmem:[%s5 + $0x90] sm:$0xff]
  %v228 = vld [vmem:[%s5 + $0x98] sm:$0xff]
  %v229 = vld [vmem:[%s5 + $0xa0] sm:$0xff]
  %v230 = vld [vmem:[%s5 + $0xa8] sm:$0xff]
  %v231 = vld [vmem:[%s5 + $0xb0] sm:$0xff]
  %v232 = vld [vmem:[%s5 + $0xb8] sm:$0xff]
  %v233 = vld [vmem:[%s5 + $0xc0] sm:$0xff]
  %v234 = vld [vmem:[%s5 + $0xc8] sm:$0xff]
  %v235 = vld [vmem:[%s5 + $0xd0] sm:$0xff]
  %v236 = vld [vmem:[%s5 + $0xd8] sm:$0xff]
  %v237 = vld [vmem:[%s5 + $0xe0] sm:$0xff]
  %v238 = vld [vmem:[%s5 + $0xe8] sm:$0xff]
  %v239 = vld [vmem:[%s5 + $0xf0] sm:$0xff]
  %v240 = vld [vmem:[%s5 + $0xf8] sm:$0xff]
  %v241 = vld [vmem:[%s5 + $0x100] sm:$0xff]
  %v242 = vld [vmem:[%s5 + $0x108] sm:$0xff]
  %v243 = vld [vmem:[%s5 + $0x110] sm:$0xff]
  %v244 = vld [vmem:[%s5 + $0x118] sm:$0xff]
  %v245 = vld [vmem:[%s5 + $0x120] sm:$0xff]
  %v246 = vld [vmem:[%s5 + $0x128] sm:$0xff]
  %v247 = vld [vmem:[%s5 + $0x130] sm:$0xff]
  %v248 = vld [vmem:[%s5 + $0x138] sm:$0xff]
  %v249 = vld [vmem:[%s5 + $0x140] sm:$0xff]
  %v250 = vld [vmem:[%s5 + $0x148] sm:$0xff]
  %v251 = vld [vmem:[%s5 + $0x150] sm:$0xff]
  %v252 = vld [vmem:[%s5 + $0x158] sm:$0xff]
  %v253 = vld [vmem:[%s5 + $0x160] sm:$0xff]
  %v254 = vld [vmem:[%s5 + $0x168] sm:$0xff]
  %v255 = vld [vmem:[%s5 + $0x170] sm:$0xff]
  %v256 = vld [vmem:[%s5 + $0x178] sm:$0xff]
  %v257 = vld [vmem:[%s5 + $0x180] sm:$0xff]
  %v258 = vld [vmem:[%s5 + $0x188] sm:$0xff]
  %v259 = vld [vmem:[%s5 + $0x190] sm:$0xff]
  %v260 = vld [vmem:[%s5 + $0x198] sm:$0xff]
  %v261 = vld [vmem:[%s5 + $0x1a0] sm:$0xff]
  %v262 = vld [vmem:[%s5 + $0x1a8] sm:$0xff]
  %v263 = vld [vmem:[%s5 + $0x1b0] sm:$0xff]
  %v264 = vld [vmem:[%s5 + $0x1b8] sm:$0xff]
  %v265 = vld [vmem:[%s5 + $0x1c0] sm:$0xff]
  %v266 = vld [vmem:[%s5 + $0x1c8] sm:$0xff]
  %v267 = vld [vmem:[%s5 + $0x1d0] sm:$0xff]
  %v268 = vld [vmem:[%s5 + $0x1d8] sm:$0xff]
  %v269 = vld [vmem:[%s5 + $0x1e0] sm:$0xff]
  %v270 = vld [vmem:[%s5 + $0x1e8] sm:$0xff]
  %v271 = vld [vmem:[%s5 + $0x1f0] sm:$0xff]
  %v272 = vld [vmem:[%s5 + $0x1f8] sm:$0xff]
  %v273 = vld [vmem:[%s5 + $0x200] sm:$0xff]
  %v274 = vld [vmem:[%s5 + $0x208] sm:$0xff]
  %v275 = vld [vmem:[%s5 + $0x210] sm:$0xff]
  %v276 = vld [vmem:[%s5 + $0x218] sm:$0xff]
  %v277 = vld [vmem:[%s5 + $0x220] sm:$0xff]
  %v278 = vld [vmem:[%s5 + $0x228] sm:$0xff]
  %v279 = vld [vmem:[%s5 + $0x230] sm:$0xff]
  %v280 = vld [vmem:[%s5 + $0x238] sm:$0xff]
  %v281 = vld [vmem:[%s5 + $0x240] sm:$0xff]
  %v282 = vld [vmem:[%s5 + $0x248] sm:$0xff]
  %v283 = vld [vmem:[%s5 + $0x250] sm:$0xff]
  %v284 = vld [vmem:[%s5 + $0x258] sm:$0xff]
  %v285 = vld [vmem:[%s5 + $0x260] sm:$0xff]
  %v286 = vld [vmem:[%s5 + $0x268] sm:$0xff]
  %v287 = vld [vmem:[%s5 + $0x270] sm:$0xff]
  %v288 = vld [vmem:[%s5 + $0x278] sm:$0xff]
  %v289 = vld [vmem:[%s6] sm:$0x1f]
  %v291 = vlaneseq
  %v292 = vshrl.u32 %v291, 7
  %v293 = vsub.s32 0, %v292
  %v294 = vrot.slane %v289, %v293
  %v295 = vlaneseq
  %v296 = vshrl.u32 %v295, 7
  %v297 = vsub.s32 1, %v296
  %v298 = vrot.slane %v289, %v297
  %v299 = vlaneseq
  %v300 = vshrl.u32 %v299, 7
  %v301 = vsub.s32 2, %v300
  %v302 = vrot.slane %v289, %v301
  %v303 = vlaneseq
  %v304 = vshrl.u32 %v303, 7
  %v305 = vsub.s32 3, %v304
  %v306 = vrot.slane %v289, %v305
  %v307 = vlaneseq
  %v308 = vshrl.u32 %v307, 7
  %v309 = vsub.s32 4, %v308
  %v310 = vrot.slane %v289, %v309
  %316 = vmatprep.subr.mxu0 %v210
  %317 = vmatpush1.msra.mxu0 %v209
  %318 = vmatprep.subr.mxu0 %v215
  %319 = vmatpush1.msra.mxu0 %v214
  %320 = vmatprep.subr.mxu0 %v220
  %321 = vmatpush1.msra.mxu0 %v219
  %322 = vmatprep.subr.mxu0 %v225
  %323 = vmatpush1.msra.mxu0 %v224
  %324 = vmatprep.subr.mxu0 %v230
  %325 = vmatpush1.msra.mxu0 %v229
  %326 = vmatprep.subr.mxu0 %v235
  %327 = vmatpush1.msra.mxu0 %v234
  %328 = vmatprep.subr.mxu0 %v240
  %329 = vmatpush1.msra.mxu0 %v239
  %330 = vmatprep.subr.mxu0 %v245
  %331 = vmatpush1.msra.mxu0 %v244
  %332 = vmatprep.subr.mxu0 %v250
  %333 = vmatpush1.msra.mxu0 %v249
  %334 = vmatprep.subr.mxu0 %v255
  %335 = vmatpush1.msra.mxu0 %v254
  %336 = vmatprep.subr.mxu0 %v260
  %337 = vmatpush1.msra.mxu0 %v259
  %338 = vmatprep.subr.mxu0 %v265
  %339 = vmatpush1.msra.mxu0 %v264
  %340 = vmatprep.subr.mxu0 %v270
  %341 = vmatpush1.msra.mxu0 %v269
  %342 = vmatprep.subr.mxu0 %v275
  %343 = vmatpush1.msra.mxu0 %v274
  %344 = vmatprep.subr.mxu0 %v280
  %345 = vmatpush1.msra.mxu0 %v279
  %346 = vmatprep.subr.mxu0 %v285
  %347 = vmatpush1.msra.mxu0 %v284
  %348 = vmatprep.subr.mxu0 0.0
  %349 = vmatpush1.msra.mxu0 0.0
  %350 = vmatprep.subr.mxu0 0.0
  %351 = vmatpush1.msra.mxu0 0.0
  %352 = vmatprep.subr.mxu0 0.0
  %353 = vmatpush1.msra.mxu0 0.0
  %354 = vmatprep.subr.mxu0 0.0
  %355 = vmatpush1.msra.mxu0 0.0
  %356 = vmatprep.subr.mxu0 0.0
  %357 = vmatpush1.msra.mxu0 0.0
  %358 = vmatprep.subr.mxu0 0.0
  %359 = vmatpush1.msra.mxu0 0.0
  %360 = vmatprep.subr.mxu0 0.0
  %361 = vmatpush1.msra.mxu0 0.0
  %362 = vmatprep.subr.mxu0 0.0
  %363 = vmatpush1.msra.mxu0 0.0
  %364 = vmatprep.subr.mxu0 0.0
  %365 = vmatpush1.msra.mxu0 0.0
  %366 = vmatprep.subr.mxu0 0.0
  %367 = vmatpush1.msra.mxu0 0.0
  %368 = vmatprep.subr.mxu0 0.0
  %369 = vmatpush1.msra.mxu0 0.0
  %370 = vmatprep.subr.mxu0 0.0
  %371 = vmatpush1.msra.mxu0 0.0
  %372 = vmatprep.subr.mxu0 0.0
  %373 = vmatpush1.msra.mxu0 0.0
  %374 = vmatprep.subr.mxu0 0.0
  %375 = vmatpush1.msra.mxu0 0.0
  %376 = vmatprep.subr.mxu0 0.0
  %377 = vmatpush1.msra.mxu0 0.0
  %378 = vmatprep.subr.mxu0 0.0
  %379 = vmatpush1.msra.mxu0 0.0
  %380 = vmatprep.mubr.f32.mxu0 0.0
  %381 = vmatmul.mubr.f32.gmra.mrb[0].mxu0 %v208
  %v382 = vpop.f32.mrb[0].mxu0
  %v383 = vadd.f32 %v294, %v382
  %v384 = vpop.f32.mrb[0].mxu0
  %v385 = vadd.f32 %v298, %v384
  %386 = vdwg.mxu0
  %387 = vmatprep.subr.mxu0 %v212
  %388 = vmatpush1.msra.mxu0 %v211
  %389 = vmatprep.subr.mxu0 %v217
  %390 = vmatpush1.msra.mxu0 %v216
  %391 = vmatprep.subr.mxu0 %v222
  %392 = vmatpush1.msra.mxu0 %v221
  %393 = vmatprep.subr.mxu0 %v227
  %394 = vmatpush1.msra.mxu0 %v226
  %395 = vmatprep.subr.mxu0 %v232
  %396 = vmatpush1.msra.mxu0 %v231
  %397 = vmatprep.subr.mxu0 %v237
  %398 = vmatpush1.msra.mxu0 %v236
  %399 = vmatprep.subr.mxu0 %v242
  %400 = vmatpush1.msra.mxu0 %v241
  %401 = vmatprep.subr.mxu0 %v247
  %402 = vmatpush1.msra.mxu0 %v246
  %403 = vmatprep.subr.mxu0 %v252
  %404 = vmatpush1.msra.mxu0 %v251
  %405 = vmatprep.subr.mxu0 %v257
  %406 = vmatpush1.msra.mxu0 %v256
  %407 = vmatprep.subr.mxu0 %v262
  %408 = vmatpush1.msra.mxu0 %v261
  %409 = vmatprep.subr.mxu0 %v267
  %410 = vmatpush1.msra.mxu0 %v266
  %411 = vmatprep.subr.mxu0 %v272
  %412 = vmatpush1.msra.mxu0 %v271
  %413 = vmatprep.subr.mxu0 %v277
  %414 = vmatpush1.msra.mxu0 %v276
  %415 = vmatprep.subr.mxu0 %v282
  %416 = vmatpush1.msra.mxu0 %v281
  %417 = vmatprep.subr.mxu0 %v287
  %418 = vmatpush1.msra.mxu0 %v286
  %419 = vmatprep.subr.mxu0 0.0
  %420 = vmatpush1.msra.mxu0 0.0
  %421 = vmatprep.subr.mxu0 0.0
  %422 = vmatpush1.msra.mxu0 0.0
  %423 = vmatprep.subr.mxu0 0.0
  %424 = vmatpush1.msra.mxu0 0.0
  %425 = vmatprep.subr.mxu0 0.0
  %426 = vmatpush1.msra.mxu0 0.0
  %427 = vmatprep.subr.mxu0 0.0
  %428 = vmatpush1.msra.mxu0 0.0
  %429 = vmatprep.subr.mxu0 0.0
  %430 = vmatpush1.msra.mxu0 0.0
  %431 = vmatprep.subr.mxu0 0.0
  %432 = vmatpush1.msra.mxu0 0.0
  %433 = vmatprep.subr.mxu0 0.0
  %434 = vmatpush1.msra.mxu0 0.0
  %435 = vmatprep.subr.mxu0 0.0
  %436 = vmatpush1.msra.mxu0 0.0
  %437 = vmatprep.subr.mxu0 0.0
  %438 = vmatpush1.msra.mxu0 0.0
  %439 = vmatprep.subr.mxu0 0.0
  %440 = vmatpush1.msra.mxu0 0.0
  %441 = vmatprep.subr.mxu0 0.0
  %442 = vmatpush1.msra.mxu0 0.0
  %443 = vmatprep.subr.mxu0 0.0
  %444 = vmatpush1.msra.mxu0 0.0
  %445 = vmatprep.subr.mxu0 0.0
  %446 = vmatpush1.msra.mxu0 0.0
  %447 = vmatprep.subr.mxu0 0.0
  %448 = vmatpush1.msra.mxu0 0.0
  %449 = vmatprep.subr.mxu0 0.0
  %450 = vmatpush1.msra.mxu0 0.0
  %451 = vmatprep.mubr.f32.mxu0 0.0
  %452 = vmatmul.mubr.f32.gmra.mrb[0].mxu0 %v208
  %v453 = vpop.f32.mrb[0].mxu0
  %v454 = vadd.f32 %v302, %v453
  %v455 = vpop.f32.mrb[0].mxu0
  %v456 = vadd.f32 %v306, %v455
  %457 = vdwg.mxu0
  %458 = vmatprep.subr.mxu0 0.0
  %459 = vmatpush1.msra.mxu0 %v213
  %460 = vmatprep.subr.mxu0 0.0
  %461 = vmatpush1.msra.mxu0 %v218
  %462 = vmatprep.subr.mxu0 0.0
  %463 = vmatpush1.msra.mxu0 %v223
  %464 = vmatprep.subr.mxu0 0.0
  %465 = vmatpush1.msra.mxu0 %v228
  %466 = vmatprep.subr.mxu0 0.0
  %467 = vmatpush1.msra.mxu0 %v233
  %468 = vmatprep.subr.mxu0 0.0
  %469 = vmatpush1.msra.mxu0 %v238
  %470 = vmatprep.subr.mxu0 0.0
  %471 = vmatpush1.msra.mxu0 %v243
  %472 = vmatprep.subr.mxu0 0.0
  %473 = vmatpush1.msra.mxu0 %v248
  %474 = vmatprep.subr.mxu0 0.0
  %475 = vmatpush1.msra.mxu0 %v253
  %476 = vmatprep.subr.mxu0 0.0
  %477 = vmatpush1.msra.mxu0 %v258
  %478 = vmatprep.subr.mxu0 0.0
  %479 = vmatpush1.msra.mxu0 %v263
  %480 = vmatprep.subr.mxu0 0.0
  %481 = vmatpush1.msra.mxu0 %v268
  %482 = vmatprep.subr.mxu0 0.0
  %483 = vmatpush1.msra.mxu0 %v273
  %484 = vmatprep.subr.mxu0 0.0
  %485 = vmatpush1.msra.mxu0 %v278
  %486 = vmatprep.subr.mxu0 0.0
  %487 = vmatpush1.msra.mxu0 %v283
  %488 = vmatprep.subr.mxu0 0.0
  %489 = vmatpush1.msra.mxu0 %v288
  %490 = vmatprep.subr.mxu0 0.0
  %491 = vmatpush1.msra.mxu0 0.0
  %492 = vmatprep.subr.mxu0 0.0
  %493 = vmatpush1.msra.mxu0 0.0
  %494 = vmatprep.subr.mxu0 0.0
  %495 = vmatpush1.msra.mxu0 0.0
  %496 = vmatprep.subr.mxu0 0.0
  %497 = vmatpush1.msra.mxu0 0.0
  %498 = vmatprep.subr.mxu0 0.0
  %499 = vmatpush1.msra.mxu0 0.0
  %500 = vmatprep.subr.mxu0 0.0
  %501 = vmatpush1.msra.mxu0 0.0
  %502 = vmatprep.subr.mxu0 0.0
  %503 = vmatpush1.msra.mxu0 0.0
  %504 = vmatprep.subr.mxu0 0.0
  %505 = vmatpush1.msra.mxu0 0.0
  %506 = vmatprep.subr.mxu0 0.0
  %507 = vmatpush1.msra.mxu0 0.0
  %508 = vmatprep.subr.mxu0 0.0
  %509 = vmatpush1.msra.mxu0 0.0
  %510 = vmatprep.subr.mxu0 0.0
  %511 = vmatpush1.msra.mxu0 0.0
  %512 = vmatprep.subr.mxu0 0.0
  %513 = vmatpush1.msra.mxu0 0.0
  %514 = vmatprep.subr.mxu0 0.0
  %515 = vmatpush1.msra.mxu0 0.0
  %516 = vmatprep.subr.mxu0 0.0
  %517 = vmatpush1.msra.mxu0 0.0
  %518 = vmatprep.subr.mxu0 0.0
  %519 = vmatpush1.msra.mxu0 0.0
  %520 = vmatprep.subr.mxu0 0.0
  %521 = vmatpush1.msra.mxu0 0.0
  %522 = vmatprep.mubr.f32.mxu0 0.0
  %523 = vmatmul.mubr.f32.gmra.mrb[0].mxu0 %v208
  %v524 = vpop.f32.mrb[0].mxu0
  %v525 = vadd.f32 %v310, %v524
  %v526 = vpop.f32.mrb[0].mxu0
  %527 = vdwg.mxu0
  %v528 = vmax.f32 %v383, 0.0
  %v529 = vmax.f32 %v385, 0.0
  %v530 = vmax.f32 %v454, 0.0
  %v531 = vmax.f32 %v456, 0.0
  %v532 = vmax.f32 %v525, 0.0
  %v533 = vld [vmem:[%s7] sm:$0xff]
  %v534 = vld [vmem:[%s7 + $0x8] sm:$0xff]
  %v535 = vld [vmem:[%s7 + $0x10] sm:$0xff]
  %v536 = vld [vmem:[%s7 + $0x18] sm:$0xff]
  %v537 = vld [vmem:[%s7 + $0x20] sm:$0xff]
  %v538 = vld [vmem:[%s7 + $0x28] sm:$0xff]
  %v539 = vld [vmem:[%s7 + $0x30] sm:$0xff]
  %v540 = vld [vmem:[%s7 + $0x38] sm:$0xff]
  %v541 = vld [vmem:[%s7 + $0x40] sm:$0xff]
  %v542 = vld [vmem:[%s7 + $0x48] sm:$0xff]
  %v543 = vld [vmem:[%s7 + $0x50] sm:$0xff]
  %v544 = vld [vmem:[%s7 + $0x58] sm:$0xff]
  %v545 = vld [vmem:[%s7 + $0x60] sm:$0xff]
  %v546 = vld [vmem:[%s7 + $0x68] sm:$0xff]
  %v547 = vld [vmem:[%s7 + $0x70] sm:$0xff]
  %v548 = vld [vmem:[%s7 + $0x78] sm:$0xff]
  %v549 = vld [vmem:[%s7 + $0x80] sm:$0xff]
  %v550 = vld [vmem:[%s7 + $0x88] sm:$0xff]
  %v551 = vld [vmem:[%s7 + $0x90] sm:$0xff]
  %v552 = vld [vmem:[%s7 + $0x98] sm:$0xff]
  %v553 = vld [vmem:[%s7 + $0xa0] sm:$0xff]
  %v554 = vld [vmem:[%s7 + $0xa8] sm:$0xff]
  %v555 = vld [vmem:[%s7 + $0xb0] sm:$0xff]
  %v556 = vld [vmem:[%s7 + $0xb8] sm:$0xff]
  %v557 = vld [vmem:[%s7 + $0xc0] sm:$0xff]
  %v558 = vld [vmem:[%s7 + $0xc8] sm:$0xff]
  %v559 = vld [vmem:[%s7 + $0xd0] sm:$0xff]
  %v560 = vld [vmem:[%s7 + $0xd8] sm:$0xff]
  %v561 = vld [vmem:[%s7 + $0xe0] sm:$0xff]
  %v562 = vld [vmem:[%s7 + $0xe8] sm:$0xff]
  %v563 = vld [vmem:[%s7 + $0xf0] sm:$0xff]
  %v564 = vld [vmem:[%s7 + $0xf8] sm:$0xff]
  %v565 = vld [vmem:[%s7 + $0x100] sm:$0xff]
  %v566 = vld [vmem:[%s7 + $0x108] sm:$0xff]
  %v567 = vld [vmem:[%s7 + $0x110] sm:$0xff]
  %v568 = vld [vmem:[%s7 + $0x118] sm:$0xff]
  %v569 = vld [vmem:[%s7 + $0x120] sm:$0xff]
  %v570 = vld [vmem:[%s7 + $0x128] sm:$0xff]
  %v571 = vld [vmem:[%s7 + $0x130] sm:$0xff]
  %v572 = vld [vmem:[%s7 + $0x138] sm:$0xff]
  %v573 = vld [vmem:[%s7 + $0x140] sm:$0xff]
  %v574 = vld [vmem:[%s7 + $0x148] sm:$0xff]
  %v575 = vld [vmem:[%s7 + $0x150] sm:$0xff]
  %v576 = vld [vmem:[%s7 + $0x158] sm:$0xff]
  %v577 = vld [vmem:[%s7 + $0x160] sm:$0xff]
  %v578 = vld [vmem:[%s7 + $0x168] sm:$0xff]
  %v579 = vld [vmem:[%s7 + $0x170] sm:$0xff]
  %v580 = vld [vmem:[%s7 + $0x178] sm:$0xff]
  %v581 = vld [vmem:[%s7 + $0x180] sm:$0xff]
  %v582 = vld [vmem:[%s7 + $0x188] sm:$0xff]
  %v583 = vld [vmem:[%s7 + $0x190] sm:$0xff]
  %v584 = vld [vmem:[%s7 + $0x198] sm:$0xff]
  %v585 = vld [vmem:[%s7 + $0x1a0] sm:$0xff]
  %v586 = vld [vmem:[%s7 + $0x1a8] sm:$0xff]
  %v587 = vld [vmem:[%s7 + $0x1b0] sm:$0xff]
  %v588 = vld [vmem:[%s7 + $0x1b8] sm:$0xff]
  %v589 = vld [vmem:[%s7 + $0x1c0] sm:$0xff]
  %v590 = vld [vmem:[%s7 + $0x1c8] sm:$0xff]
  %v591 = vld [vmem:[%s7 + $0x1d0] sm:$0xff]
  %v592 = vld [vmem:[%s7 + $0x1d8] sm:$0xff]
  %v593 = vld [vmem:[%s7 + $0x1e0] sm:$0xff]
  %v594 = vld [vmem:[%s7 + $0x1e8] sm:$0xff]
  %v595 = vld [vmem:[%s7 + $0x1f0] sm:$0xff]
  %v596 = vld [vmem:[%s7 + $0x1f8] sm:$0xff]
  %v597 = vld [vmem:[%s7 + $0x200] sm:$0xff]
  %v598 = vld [vmem:[%s7 + $0x208] sm:$0xff]
  %v599 = vld [vmem:[%s7 + $0x210] sm:$0xff]
  %v600 = vld [vmem:[%s7 + $0x218] sm:$0xff]
  %v601 = vld [vmem:[%s7 + $0x220] sm:$0xff]
  %v602 = vld [vmem:[%s7 + $0x228] sm:$0xff]
  %v603 = vld [vmem:[%s7 + $0x230] sm:$0xff]
  %v604 = vld [vmem:[%s7 + $0x238] sm:$0xff]
  %v605 = vld [vmem:[%s7 + $0x240] sm:$0xff]
  %v606 = vld [vmem:[%s7 + $0x248] sm:$0xff]
  %v607 = vld [vmem:[%s7 + $0x250] sm:$0xff]
  %v608 = vld [vmem:[%s7 + $0x258] sm:$0xff]
  %v609 = vld [vmem:[%s7 + $0x260] sm:$0xff]
  %v610 = vld [vmem:[%s7 + $0x268] sm:$0xff]
  %v611 = vld [vmem:[%s7 + $0x270] sm:$0xff]
  %v612 = vld [vmem:[%s7 + $0x278] sm:$0xff]
  %v613 = vld [vmem:[%s7 + $0x280] sm:$0xff]
  %v614 = vld [vmem:[%s7 + $0x288] sm:$0xff]
  %v615 = vld [vmem:[%s7 + $0x290] sm:$0xff]
  %v616 = vld [vmem:[%s7 + $0x298] sm:$0xff]
  %v617 = vld [vmem:[%s7 + $0x2a0] sm:$0xff]
  %v618 = vld [vmem:[%s7 + $0x2a8] sm:$0xff]
  %v619 = vld [vmem:[%s7 + $0x2b0] sm:$0xff]
  %v620 = vld [vmem:[%s7 + $0x2b8] sm:$0xff]
  %v621 = vld [vmem:[%s7 + $0x2c0] sm:$0xff]
  %v622 = vld [vmem:[%s7 + $0x2c8] sm:$0xff]
  %v623 = vld [vmem:[%s7 + $0x2d0] sm:$0xff]
  %v624 = vld [vmem:[%s7 + $0x2d8] sm:$0xff]
  %v625 = vld [vmem:[%s7 + $0x2e0] sm:$0xff]
  %v626 = vld [vmem:[%s7 + $0x2e8] sm:$0xff]
  %v627 = vld [vmem:[%s7 + $0x2f0] sm:$0xff]
  %v628 = vld [vmem:[%s7 + $0x2f8] sm:$0xff]
  %v629 = vld [vmem:[%s7 + $0x300] sm:$0xff]
  %v630 = vld [vmem:[%s7 + $0x308] sm:$0xff]
  %v631 = vld [vmem:[%s7 + $0x310] sm:$0xff]
  %v632 = vld [vmem:[%s7 + $0x318] sm:$0xff]
  %v633 = vld [vmem:[%s7 + $0x320] sm:$0xff]
  %v634 = vld [vmem:[%s7 + $0x328] sm:$0xff]
  %v635 = vld [vmem:[%s7 + $0x330] sm:$0xff]
  %v636 = vld [vmem:[%s7 + $0x338] sm:$0xff]
  %v637 = vld [vmem:[%s7 + $0x340] sm:$0xff]
  %v638 = vld [vmem:[%s7 + $0x348] sm:$0xff]
  %v639 = vld [vmem:[%s7 + $0x350] sm:$0xff]
  %v640 = vld [vmem:[%s7 + $0x358] sm:$0xff]
  %v641 = vld [vmem:[%s7 + $0x360] sm:$0xff]
  %v642 = vld [vmem:[%s7 + $0x368] sm:$0xff]
  %v643 = vld [vmem:[%s7 + $0x370] sm:$0xff]
  %v644 = vld [vmem:[%s7 + $0x378] sm:$0xff]
  %v645 = vld [vmem:[%s7 + $0x380] sm:$0xff]
  %v646 = vld [vmem:[%s7 + $0x388] sm:$0xff]
  %v647 = vld [vmem:[%s7 + $0x390] sm:$0xff]
  %v648 = vld [vmem:[%s7 + $0x398] sm:$0xff]
  %v649 = vld [vmem:[%s7 + $0x3a0] sm:$0xff]
  %v650 = vld [vmem:[%s7 + $0x3a8] sm:$0xff]
  %v651 = vld [vmem:[%s7 + $0x3b0] sm:$0xff]
  %v652 = vld [vmem:[%s7 + $0x3b8] sm:$0xff]
  %v653 = vld [vmem:[%s7 + $0x3c0] sm:$0xff]
  %v654 = vld [vmem:[%s7 + $0x3c8] sm:$0xff]
  %v655 = vld [vmem:[%s7 + $0x3d0] sm:$0xff]
  %v656 = vld [vmem:[%s7 + $0x3d8] sm:$0xff]
  %v657 = vld [vmem:[%s7 + $0x3e0] sm:$0xff]
  %v658 = vld [vmem:[%s7 + $0x3e8] sm:$0xff]
  %v659 = vld [vmem:[%s7 + $0x3f0] sm:$0xff]
  %v660 = vld [vmem:[%s7 + $0x3f8] sm:$0xff]
  %v661 = vld [vmem:[%s7 + $0x400] sm:$0xff]
  %v662 = vld [vmem:[%s7 + $0x408] sm:$0xff]
  %v663 = vld [vmem:[%s7 + $0x410] sm:$0xff]
  %v664 = vld [vmem:[%s7 + $0x418] sm:$0xff]
  %v665 = vld [vmem:[%s7 + $0x420] sm:$0xff]
  %v666 = vld [vmem:[%s7 + $0x428] sm:$0xff]
  %v667 = vld [vmem:[%s7 + $0x430] sm:$0xff]
  %v668 = vld [vmem:[%s7 + $0x438] sm:$0xff]
  %v669 = vld [vmem:[%s7 + $0x440] sm:$0xff]
  %v670 = vld [vmem:[%s7 + $0x448] sm:$0xff]
  %v671 = vld [vmem:[%s7 + $0x450] sm:$0xff]
  %v672 = vld [vmem:[%s7 + $0x458] sm:$0xff]
  %v673 = vld [vmem:[%s7 + $0x460] sm:$0xff]
  %v674 = vld [vmem:[%s7 + $0x468] sm:$0xff]
  %v675 = vld [vmem:[%s7 + $0x470] sm:$0xff]
  %v676 = vld [vmem:[%s7 + $0x478] sm:$0xff]
  %v677 = vld [vmem:[%s7 + $0x480] sm:$0xff]
  %v678 = vld [vmem:[%s7 + $0x488] sm:$0xff]
  %v679 = vld [vmem:[%s7 + $0x490] sm:$0xff]
  %v680 = vld [vmem:[%s7 + $0x498] sm:$0xff]
  %v681 = vld [vmem:[%s7 + $0x4a0] sm:$0xff]
  %v682 = vld [vmem:[%s7 + $0x4a8] sm:$0xff]
  %v683 = vld [vmem:[%s7 + $0x4b0] sm:$0xff]
  %v684 = vld [vmem:[%s7 + $0x4b8] sm:$0xff]
  %v685 = vld [vmem:[%s7 + $0x4c0] sm:$0xff]
  %v686 = vld [vmem:[%s7 + $0x4c8] sm:$0xff]
  %v687 = vld [vmem:[%s7 + $0x4d0] sm:$0xff]
  %v688 = vld [vmem:[%s7 + $0x4d8] sm:$0xff]
  %v689 = vld [vmem:[%s7 + $0x4e0] sm:$0xff]
  %v690 = vld [vmem:[%s7 + $0x4e8] sm:$0xff]
  %v691 = vld [vmem:[%s7 + $0x4f0] sm:$0xff]
  %v692 = vld [vmem:[%s7 + $0x4f8] sm:$0xff]
  %v693 = vld [vmem:[%s7 + $0x500] sm:$0xff]
  %v694 = vld [vmem:[%s7 + $0x508] sm:$0xff]
  %v695 = vld [vmem:[%s7 + $0x510] sm:$0xff]
  %v696 = vld [vmem:[%s7 + $0x518] sm:$0xff]
  %v697 = vld [vmem:[%s7 + $0x520] sm:$0xff]
  %v698 = vld [vmem:[%s7 + $0x528] sm:$0xff]
  %v699 = vld [vmem:[%s7 + $0x530] sm:$0xff]
  %v700 = vld [vmem:[%s7 + $0x538] sm:$0xff]
  %v701 = vld [vmem:[%s7 + $0x540] sm:$0xff]
  %v702 = vld [vmem:[%s7 + $0x548] sm:$0xff]
  %v703 = vld [vmem:[%s7 + $0x550] sm:$0xff]
  %v704 = vld [vmem:[%s7 + $0x558] sm:$0xff]
  %v705 = vld [vmem:[%s7 + $0x560] sm:$0xff]
  %v706 = vld [vmem:[%s7 + $0x568] sm:$0xff]
  %v707 = vld [vmem:[%s7 + $0x570] sm:$0xff]
  %v708 = vld [vmem:[%s7 + $0x578] sm:$0xff]
  %v709 = vld [vmem:[%s7 + $0x580] sm:$0xff]
  %v710 = vld [vmem:[%s7 + $0x588] sm:$0xff]
  %v711 = vld [vmem:[%s7 + $0x590] sm:$0xff]
  %v712 = vld [vmem:[%s7 + $0x598] sm:$0xff]
  %v713 = vld [vmem:[%s7 + $0x5a0] sm:$0xff]
  %v714 = vld [vmem:[%s7 + $0x5a8] sm:$0xff]
  %v715 = vld [vmem:[%s7 + $0x5b0] sm:$0xff]
  %v716 = vld [vmem:[%s7 + $0x5b8] sm:$0xff]
  %v717 = vld [vmem:[%s7 + $0x5c0] sm:$0xff]
  %v718 = vld [vmem:[%s7 + $0x5c8] sm:$0xff]
  %v719 = vld [vmem:[%s7 + $0x5d0] sm:$0xff]
  %v720 = vld [vmem:[%s7 + $0x5d8] sm:$0xff]
  %v721 = vld [vmem:[%s7 + $0x5e0] sm:$0xff]
  %v722 = vld [vmem:[%s7 + $0x5e8] sm:$0xff]
  %v723 = vld [vmem:[%s7 + $0x5f0] sm:$0xff]
  %v724 = vld [vmem:[%s7 + $0x5f8] sm:$0xff]
  %v725 = vld [vmem:[%s7 + $0x600] sm:$0xff]
  %v726 = vld [vmem:[%s7 + $0x608] sm:$0xff]
  %v727 = vld [vmem:[%s7 + $0x610] sm:$0xff]
  %v728 = vld [vmem:[%s7 + $0x618] sm:$0xff]
  %v729 = vld [vmem:[%s7 + $0x620] sm:$0xff]
  %v730 = vld [vmem:[%s7 + $0x628] sm:$0xff]
  %v731 = vld [vmem:[%s7 + $0x630] sm:$0xff]
  %v732 = vld [vmem:[%s7 + $0x638] sm:$0xff]
  %v733 = vld [vmem:[%s7 + $0x640] sm:$0xff]
  %v734 = vld [vmem:[%s7 + $0x648] sm:$0xff]
  %v735 = vld [vmem:[%s7 + $0x650] sm:$0xff]
  %v736 = vld [vmem:[%s7 + $0x658] sm:$0xff]
  %v737 = vld [vmem:[%s7 + $0x660] sm:$0xff]
  %v738 = vld [vmem:[%s7 + $0x668] sm:$0xff]
  %v739 = vld [vmem:[%s7 + $0x670] sm:$0xff]
  %v740 = vld [vmem:[%s7 + $0x678] sm:$0xff]
  %v741 = vld [vmem:[%s7 + $0x680] sm:$0xff]
  %v742 = vld [vmem:[%s7 + $0x688] sm:$0xff]
  %v743 = vld [vmem:[%s7 + $0x690] sm:$0xff]
  %v744 = vld [vmem:[%s7 + $0x698] sm:$0xff]
  %v745 = vld [vmem:[%s7 + $0x6a0] sm:$0xff]
  %v746 = vld [vmem:[%s7 + $0x6a8] sm:$0xff]
  %v747 = vld [vmem:[%s7 + $0x6b0] sm:$0xff]
  %v748 = vld [vmem:[%s7 + $0x6b8] sm:$0xff]
  %v749 = vld [vmem:[%s7 + $0x6c0] sm:$0xff]
  %v750 = vld [vmem:[%s7 + $0x6c8] sm:$0xff]
  %v751 = vld [vmem:[%s7 + $0x6d0] sm:$0xff]
  %v752 = vld [vmem:[%s7 + $0x6d8] sm:$0xff]
  %v753 = vld [vmem:[%s7 + $0x6e0] sm:$0xff]
  %v754 = vld [vmem:[%s7 + $0x6e8] sm:$0xff]
  %v755 = vld [vmem:[%s7 + $0x6f0] sm:$0xff]
  %v756 = vld [vmem:[%s7 + $0x6f8] sm:$0xff]
  %v757 = vld [vmem:[%s7 + $0x700] sm:$0xff]
  %v758 = vld [vmem:[%s7 + $0x708] sm:$0xff]
  %v759 = vld [vmem:[%s7 + $0x710] sm:$0xff]
  %v760 = vld [vmem:[%s7 + $0x718] sm:$0xff]
  %v761 = vld [vmem:[%s7 + $0x720] sm:$0xff]
  %v762 = vld [vmem:[%s7 + $0x728] sm:$0xff]
  %v763 = vld [vmem:[%s7 + $0x730] sm:$0xff]
  %v764 = vld [vmem:[%s7 + $0x738] sm:$0xff]
  %v765 = vld [vmem:[%s7 + $0x740] sm:$0xff]
  %v766 = vld [vmem:[%s7 + $0x748] sm:$0xff]
  %v767 = vld [vmem:[%s7 + $0x750] sm:$0xff]
  %v768 = vld [vmem:[%s7 + $0x758] sm:$0xff]
  %v769 = vld [vmem:[%s7 + $0x760] sm:$0xff]
  %v770 = vld [vmem:[%s7 + $0x768] sm:$0xff]
  %v771 = vld [vmem:[%s7 + $0x770] sm:$0xff]
  %v772 = vld [vmem:[%s7 + $0x778] sm:$0xff]
  %v773 = vld [vmem:[%s7 + $0x780] sm:$0xff]
  %v774 = vld [vmem:[%s7 + $0x788] sm:$0xff]
  %v775 = vld [vmem:[%s7 + $0x790] sm:$0xff]
  %v776 = vld [vmem:[%s7 + $0x798] sm:$0xff]
  %v777 = vld [vmem:[%s7 + $0x7a0] sm:$0xff]
  %v778 = vld [vmem:[%s7 + $0x7a8] sm:$0xff]
  %v779 = vld [vmem:[%s7 + $0x7b0] sm:$0xff]
  %v780 = vld [vmem:[%s7 + $0x7b8] sm:$0xff]
  %v781 = vld [vmem:[%s7 + $0x7c0] sm:$0xff]
  %v782 = vld [vmem:[%s7 + $0x7c8] sm:$0xff]
  %v783 = vld [vmem:[%s7 + $0x7d0] sm:$0xff]
  %v784 = vld [vmem:[%s7 + $0x7d8] sm:$0xff]
  %v785 = vld [vmem:[%s7 + $0x7e0] sm:$0xff]
  %v786 = vld [vmem:[%s7 + $0x7e8] sm:$0xff]
  %v787 = vld [vmem:[%s7 + $0x7f0] sm:$0xff]
  %v788 = vld [vmem:[%s7 + $0x7f8] sm:$0xff]
  %v789 = vld [vmem:[%s7 + $0x800] sm:$0xff]
  %v790 = vld [vmem:[%s7 + $0x808] sm:$0xff]
  %v791 = vld [vmem:[%s7 + $0x810] sm:$0xff]
  %v792 = vld [vmem:[%s7 + $0x818] sm:$0xff]
  %v793 = vld [vmem:[%s7 + $0x820] sm:$0xff]
  %v794 = vld [vmem:[%s7 + $0x828] sm:$0xff]
  %v795 = vld [vmem:[%s7 + $0x830] sm:$0xff]
  %v796 = vld [vmem:[%s7 + $0x838] sm:$0xff]
  %v797 = vld [vmem:[%s7 + $0x840] sm:$0xff]
  %v798 = vld [vmem:[%s7 + $0x848] sm:$0xff]
  %v799 = vld [vmem:[%s7 + $0x850] sm:$0xff]
  %v800 = vld [vmem:[%s7 + $0x858] sm:$0xff]
  %v801 = vld [vmem:[%s7 + $0x860] sm:$0xff]
  %v802 = vld [vmem:[%s7 + $0x868] sm:$0xff]
  %v803 = vld [vmem:[%s7 + $0x870] sm:$0xff]
  %v804 = vld [vmem:[%s7 + $0x878] sm:$0xff]
  %v805 = vld [vmem:[%s7 + $0x880] sm:$0xff]
  %v806 = vld [vmem:[%s7 + $0x888] sm:$0xff]
  %v807 = vld [vmem:[%s7 + $0x890] sm:$0xff]
  %v808 = vld [vmem:[%s7 + $0x898] sm:$0xff]
  %v809 = vld [vmem:[%s7 + $0x8a0] sm:$0xff]
  %v810 = vld [vmem:[%s7 + $0x8a8] sm:$0xff]
  %v811 = vld [vmem:[%s7 + $0x8b0] sm:$0xff]
  %v812 = vld [vmem:[%s7 + $0x8b8] sm:$0xff]
  %v813 = vld [vmem:[%s7 + $0x8c0] sm:$0xff]
  %v814 = vld [vmem:[%s7 + $0x8c8] sm:$0xff]
  %v815 = vld [vmem:[%s7 + $0x8d0] sm:$0xff]
  %v816 = vld [vmem:[%s7 + $0x8d8] sm:$0xff]
  %v817 = vld [vmem:[%s7 + $0x8e0] sm:$0xff]
  %v818 = vld [vmem:[%s7 + $0x8e8] sm:$0xff]
  %v819 = vld [vmem:[%s7 + $0x8f0] sm:$0xff]
  %v820 = vld [vmem:[%s7 + $0x8f8] sm:$0xff]
  %v821 = vld [vmem:[%s7 + $0x900] sm:$0xff]
  %v822 = vld [vmem:[%s7 + $0x908] sm:$0xff]
  %v823 = vld [vmem:[%s7 + $0x910] sm:$0xff]
  %v824 = vld [vmem:[%s7 + $0x918] sm:$0xff]
  %v825 = vld [vmem:[%s7 + $0x920] sm:$0xff]
  %v826 = vld [vmem:[%s7 + $0x928] sm:$0xff]
  %v827 = vld [vmem:[%s7 + $0x930] sm:$0xff]
  %v828 = vld [vmem:[%s7 + $0x938] sm:$0xff]
  %v829 = vld [vmem:[%s7 + $0x940] sm:$0xff]
  %v830 = vld [vmem:[%s7 + $0x948] sm:$0xff]
  %v831 = vld [vmem:[%s7 + $0x950] sm:$0xff]
  %v832 = vld [vmem:[%s7 + $0x958] sm:$0xff]
  %v833 = vld [vmem:[%s7 + $0x960] sm:$0xff]
  %v834 = vld [vmem:[%s7 + $0x968] sm:$0xff]
  %v835 = vld [vmem:[%s7 + $0x970] sm:$0xff]
  %v836 = vld [vmem:[%s7 + $0x978] sm:$0xff]
  %v837 = vld [vmem:[%s7 + $0x980] sm:$0xff]
  %v838 = vld [vmem:[%s7 + $0x988] sm:$0xff]
  %v839 = vld [vmem:[%s7 + $0x990] sm:$0xff]
  %v840 = vld [vmem:[%s7 + $0x998] sm:$0xff]
  %v841 = vld [vmem:[%s7 + $0x9a0] sm:$0xff]
  %v842 = vld [vmem:[%s7 + $0x9a8] sm:$0xff]
  %v843 = vld [vmem:[%s7 + $0x9b0] sm:$0xff]
  %v844 = vld [vmem:[%s7 + $0x9b8] sm:$0xff]
  %v845 = vld [vmem:[%s7 + $0x9c0] sm:$0xff]
  %v846 = vld [vmem:[%s7 + $0x9c8] sm:$0xff]
  %v847 = vld [vmem:[%s7 + $0x9d0] sm:$0xff]
  %v848 = vld [vmem:[%s7 + $0x9d8] sm:$0xff]
  %v849 = vld [vmem:[%s7 + $0x9e0] sm:$0xff]
  %v850 = vld [vmem:[%s7 + $0x9e8] sm:$0xff]
  %v851 = vld [vmem:[%s7 + $0x9f0] sm:$0xff]
  %v852 = vld [vmem:[%s7 + $0x9f8] sm:$0xff]
  %v853 = vld [vmem:[%s7 + $0xa00] sm:$0xff]
  %v854 = vld [vmem:[%s7 + $0xa08] sm:$0xff]
  %v855 = vld [vmem:[%s7 + $0xa10] sm:$0xff]
  %v856 = vld [vmem:[%s7 + $0xa18] sm:$0xff]
  %v857 = vld [vmem:[%s7 + $0xa20] sm:$0xff]
  %v858 = vld [vmem:[%s7 + $0xa28] sm:$0xff]
  %v859 = vld [vmem:[%s7 + $0xa30] sm:$0xff]
  %v860 = vld [vmem:[%s7 + $0xa38] sm:$0xff]
  %v861 = vld [vmem:[%s7 + $0xa40] sm:$0xff]
  %v862 = vld [vmem:[%s7 + $0xa48] sm:$0xff]
  %v863 = vld [vmem:[%s7 + $0xa50] sm:$0xff]
  %v864 = vld [vmem:[%s7 + $0xa58] sm:$0xff]
  %v865 = vld [vmem:[%s7 + $0xa60] sm:$0xff]
  %v866 = vld [vmem:[%s7 + $0xa68] sm:$0xff]
  %v867 = vld [vmem:[%s7 + $0xa70] sm:$0xff]
  %v868 = vld [vmem:[%s7 + $0xa78] sm:$0xff]
  %v869 = vld [vmem:[%s7 + $0xa80] sm:$0xff]
  %v870 = vld [vmem:[%s7 + $0xa88] sm:$0xff]
  %v871 = vld [vmem:[%s7 + $0xa90] sm:$0xff]
  %v872 = vld [vmem:[%s7 + $0xa98] sm:$0xff]
  %v873 = vld [vmem:[%s7 + $0xaa0] sm:$0xff]
  %v874 = vld [vmem:[%s7 + $0xaa8] sm:$0xff]
  %v875 = vld [vmem:[%s7 + $0xab0] sm:$0xff]
  %v876 = vld [vmem:[%s7 + $0xab8] sm:$0xff]
  %v877 = vld [vmem:[%s7 + $0xac0] sm:$0xff]
  %v878 = vld [vmem:[%s7 + $0xac8] sm:$0xff]
  %v879 = vld [vmem:[%s7 + $0xad0] sm:$0xff]
  %v880 = vld [vmem:[%s7 + $0xad8] sm:$0xff]
  %v881 = vld [vmem:[%s7 + $0xae0] sm:$0xff]
  %v882 = vld [vmem:[%s7 + $0xae8] sm:$0xff]
  %v883 = vld [vmem:[%s7 + $0xaf0] sm:$0xff]
  %v884 = vld [vmem:[%s7 + $0xaf8] sm:$0xff]
  %v885 = vld [vmem:[%s7 + $0xb00] sm:$0xff]
  %v886 = vld [vmem:[%s7 + $0xb08] sm:$0xff]
  %v887 = vld [vmem:[%s7 + $0xb10] sm:$0xff]
  %v888 = vld [vmem:[%s7 + $0xb18] sm:$0xff]
  %v889 = vld [vmem:[%s7 + $0xb20] sm:$0xff]
  %v890 = vld [vmem:[%s7 + $0xb28] sm:$0xff]
  %v891 = vld [vmem:[%s7 + $0xb30] sm:$0xff]
  %v892 = vld [vmem:[%s7 + $0xb38] sm:$0xff]
  %v893 = vld [vmem:[%s7 + $0xb40] sm:$0xff]
  %v894 = vld [vmem:[%s7 + $0xb48] sm:$0xff]
  %v895 = vld [vmem:[%s7 + $0xb50] sm:$0xff]
  %v896 = vld [vmem:[%s7 + $0xb58] sm:$0xff]
  %v897 = vld [vmem:[%s7 + $0xb60] sm:$0xff]
  %v898 = vld [vmem:[%s7 + $0xb68] sm:$0xff]
  %v899 = vld [vmem:[%s7 + $0xb70] sm:$0xff]
  %v900 = vld [vmem:[%s7 + $0xb78] sm:$0xff]
  %v901 = vld [vmem:[%s7 + $0xb80] sm:$0xff]
  %v902 = vld [vmem:[%s7 + $0xb88] sm:$0xff]
  %v903 = vld [vmem:[%s7 + $0xb90] sm:$0xff]
  %v904 = vld [vmem:[%s7 + $0xb98] sm:$0xff]
  %v905 = vld [vmem:[%s7 + $0xba0] sm:$0xff]
  %v906 = vld [vmem:[%s7 + $0xba8] sm:$0xff]
  %v907 = vld [vmem:[%s7 + $0xbb0] sm:$0xff]
  %v908 = vld [vmem:[%s7 + $0xbb8] sm:$0xff]
  %v909 = vld [vmem:[%s7 + $0xbc0] sm:$0xff]
  %v910 = vld [vmem:[%s7 + $0xbc8] sm:$0xff]
  %v911 = vld [vmem:[%s7 + $0xbd0] sm:$0xff]
  %v912 = vld [vmem:[%s7 + $0xbd8] sm:$0xff]
  %v913 = vld [vmem:[%s7 + $0xbe0] sm:$0xff]
  %v914 = vld [vmem:[%s7 + $0xbe8] sm:$0xff]
  %v915 = vld [vmem:[%s7 + $0xbf0] sm:$0xff]
  %v916 = vld [vmem:[%s7 + $0xbf8] sm:$0xff]
  %v917 = vld [vmem:[%s7 + $0xc00] sm:$0xff]
  %v918 = vld [vmem:[%s7 + $0xc08] sm:$0xff]
  %v919 = vld [vmem:[%s7 + $0xc10] sm:$0xff]
  %v920 = vld [vmem:[%s7 + $0xc18] sm:$0xff]
  %v921 = vld [vmem:[%s7 + $0xc20] sm:$0xff]
  %v922 = vld [vmem:[%s7 + $0xc28] sm:$0xff]
  %v923 = vld [vmem:[%s7 + $0xc30] sm:$0xff]
  %v924 = vld [vmem:[%s7 + $0xc38] sm:$0xff]
  %v925 = vld [vmem:[%s7 + $0xc40] sm:$0xff]
  %v926 = vld [vmem:[%s7 + $0xc48] sm:$0xff]
  %v927 = vld [vmem:[%s7 + $0xc50] sm:$0xff]
  %v928 = vld [vmem:[%s7 + $0xc58] sm:$0xff]
  %v929 = vld [vmem:[%s7 + $0xc60] sm:$0xff]
  %v930 = vld [vmem:[%s7 + $0xc68] sm:$0xff]
  %v931 = vld [vmem:[%s7 + $0xc70] sm:$0xff]
  %v932 = vld [vmem:[%s7 + $0xc78] sm:$0xff]
  %v933 = vld [vmem:[%s7 + $0xc80] sm:$0xff]
  %v934 = vld [vmem:[%s7 + $0xc88] sm:$0xff]
  %v935 = vld [vmem:[%s7 + $0xc90] sm:$0xff]
  %v936 = vld [vmem:[%s7 + $0xc98] sm:$0xff]
  %v937 = vld [vmem:[%s7 + $0xca0] sm:$0xff]
  %v938 = vld [vmem:[%s7 + $0xca8] sm:$0xff]
  %v939 = vld [vmem:[%s7 + $0xcb0] sm:$0xff]
  %v940 = vld [vmem:[%s7 + $0xcb8] sm:$0xff]
  %v941 = vld [vmem:[%s7 + $0xcc0] sm:$0xff]
  %v942 = vld [vmem:[%s7 + $0xcc8] sm:$0xff]
  %v943 = vld [vmem:[%s7 + $0xcd0] sm:$0xff]
  %v944 = vld [vmem:[%s7 + $0xcd8] sm:$0xff]
  %v945 = vld [vmem:[%s7 + $0xce0] sm:$0xff]
  %v946 = vld [vmem:[%s7 + $0xce8] sm:$0xff]
  %v947 = vld [vmem:[%s7 + $0xcf0] sm:$0xff]
  %v948 = vld [vmem:[%s7 + $0xcf8] sm:$0xff]
  %v949 = vld [vmem:[%s7 + $0xd00] sm:$0xff]
  %v950 = vld [vmem:[%s7 + $0xd08] sm:$0xff]
  %v951 = vld [vmem:[%s7 + $0xd10] sm:$0xff]
  %v952 = vld [vmem:[%s7 + $0xd18] sm:$0xff]
  %v953 = vld [vmem:[%s7 + $0xd20] sm:$0xff]
  %v954 = vld [vmem:[%s7 + $0xd28] sm:$0xff]
  %v955 = vld [vmem:[%s7 + $0xd30] sm:$0xff]
  %v956 = vld [vmem:[%s7 + $0xd38] sm:$0xff]
  %v957 = vld [vmem:[%s7 + $0xd40] sm:$0xff]
  %v958 = vld [vmem:[%s7 + $0xd48] sm:$0xff]
  %v959 = vld [vmem:[%s7 + $0xd50] sm:$0xff]
  %v960 = vld [vmem:[%s7 + $0xd58] sm:$0xff]
  %v961 = vld [vmem:[%s7 + $0xd60] sm:$0xff]
  %v962 = vld [vmem:[%s7 + $0xd68] sm:$0xff]
  %v963 = vld [vmem:[%s7 + $0xd70] sm:$0xff]
  %v964 = vld [vmem:[%s7 + $0xd78] sm:$0xff]
  %v965 = vld [vmem:[%s7 + $0xd80] sm:$0xff]
  %v966 = vld [vmem:[%s7 + $0xd88] sm:$0xff]
  %v967 = vld [vmem:[%s7 + $0xd90] sm:$0xff]
  %v968 = vld [vmem:[%s7 + $0xd98] sm:$0xff]
  %v969 = vld [vmem:[%s7 + $0xda0] sm:$0xff]
  %v970 = vld [vmem:[%s7 + $0xda8] sm:$0xff]
  %v971 = vld [vmem:[%s7 + $0xdb0] sm:$0xff]
  %v972 = vld [vmem:[%s7 + $0xdb8] sm:$0xff]
  %v973 = vld [vmem:[%s7 + $0xdc0] sm:$0xff]
  %v974 = vld [vmem:[%s7 + $0xdc8] sm:$0xff]
  %v975 = vld [vmem:[%s7 + $0xdd0] sm:$0xff]
  %v976 = vld [vmem:[%s7 + $0xdd8] sm:$0xff]
  %v977 = vld [vmem:[%s7 + $0xde0] sm:$0xff]
  %v978 = vld [vmem:[%s7 + $0xde8] sm:$0xff]
  %v979 = vld [vmem:[%s7 + $0xdf0] sm:$0xff]
  %v980 = vld [vmem:[%s7 + $0xdf8] sm:$0xff]
  %v981 = vld [vmem:[%s7 + $0xe00] sm:$0xff]
  %v982 = vld [vmem:[%s7 + $0xe08] sm:$0xff]
  %v983 = vld [vmem:[%s7 + $0xe10] sm:$0xff]
  %v984 = vld [vmem:[%s7 + $0xe18] sm:$0xff]
  %v985 = vld [vmem:[%s7 + $0xe20] sm:$0xff]
  %v986 = vld [vmem:[%s7 + $0xe28] sm:$0xff]
  %v987 = vld [vmem:[%s7 + $0xe30] sm:$0xff]
  %v988 = vld [vmem:[%s7 + $0xe38] sm:$0xff]
  %v989 = vld [vmem:[%s7 + $0xe40] sm:$0xff]
  %v990 = vld [vmem:[%s7 + $0xe48] sm:$0xff]
  %v991 = vld [vmem:[%s7 + $0xe50] sm:$0xff]
  %v992 = vld [vmem:[%s7 + $0xe58] sm:$0xff]
  %v993 = vld [vmem:[%s7 + $0xe60] sm:$0xff]
  %v994 = vld [vmem:[%s7 + $0xe68] sm:$0xff]
  %v995 = vld [vmem:[%s7 + $0xe70] sm:$0xff]
  %v996 = vld [vmem:[%s7 + $0xe78] sm:$0xff]
  %v997 = vld [vmem:[%s7 + $0xe80] sm:$0xff]
  %v998 = vld [vmem:[%s7 + $0xe88] sm:$0xff]
  %v999 = vld [vmem:[%s7 + $0xe90] sm:$0xff]
  %v1000 = vld [vmem:[%s7 + $0xe98] sm:$0xff]
  %v1001 = vld [vmem:[%s7 + $0xea0] sm:$0xff]
  %v1002 = vld [vmem:[%s7 + $0xea8] sm:$0xff]
  %v1003 = vld [vmem:[%s7 + $0xeb0] sm:$0xff]
  %v1004 = vld [vmem:[%s7 + $0xeb8] sm:$0xff]
  %v1005 = vld [vmem:[%s7 + $0xec0] sm:$0xff]
  %v1006 = vld [vmem:[%s7 + $0xec8] sm:$0xff]
  %v1007 = vld [vmem:[%s7 + $0xed0] sm:$0xff]
  %v1008 = vld [vmem:[%s7 + $0xed8] sm:$0xff]
  %v1009 = vld [vmem:[%s7 + $0xee0] sm:$0xff]
  %v1010 = vld [vmem:[%s7 + $0xee8] sm:$0xff]
  %v1011 = vld [vmem:[%s7 + $0xef0] sm:$0xff]
  %v1012 = vld [vmem:[%s7 + $0xef8] sm:$0xff]
  %v1013 = vld [vmem:[%s7 + $0xf00] sm:$0xff]
  %v1014 = vld [vmem:[%s7 + $0xf08] sm:$0xff]
  %v1015 = vld [vmem:[%s7 + $0xf10] sm:$0xff]
  %v1016 = vld [vmem:[%s7 + $0xf18] sm:$0xff]
  %v1017 = vld [vmem:[%s7 + $0xf20] sm:$0xff]
  %v1018 = vld [vmem:[%s7 + $0xf28] sm:$0xff]
  %v1019 = vld [vmem:[%s7 + $0xf30] sm:$0xff]
  %v1020 = vld [vmem:[%s7 + $0xf38] sm:$0xff]
  %v1021 = vld [vmem:[%s7 + $0xf40] sm:$0xff]
  %v1022 = vld [vmem:[%s7 + $0xf48] sm:$0xff]
  %v1023 = vld [vmem:[%s7 + $0xf50] sm:$0xff]
  %v1024 = vld [vmem:[%s7 + $0xf58] sm:$0xff]
  %v1025 = vld [vmem:[%s7 + $0xf60] sm:$0xff]
  %v1026 = vld [vmem:[%s7 + $0xf68] sm:$0xff]
  %v1027 = vld [vmem:[%s7 + $0xf70] sm:$0xff]
  %v1028 = vld [vmem:[%s7 + $0xf78] sm:$0xff]
  %v1029 = vld [vmem:[%s7 + $0xf80] sm:$0xff]
  %v1030 = vld [vmem:[%s7 + $0xf88] sm:$0xff]
  %v1031 = vld [vmem:[%s7 + $0xf90] sm:$0xff]
  %v1032 = vld [vmem:[%s7 + $0xf98] sm:$0xff]
  %v1033 = vld [vmem:[%s7 + $0xfa0] sm:$0xff]
  %v1034 = vld [vmem:[%s7 + $0xfa8] sm:$0xff]
  %v1035 = vld [vmem:[%s7 + $0xfb0] sm:$0xff]
  %v1036 = vld [vmem:[%s7 + $0xfb8] sm:$0xff]
  %v1037 = vld [vmem:[%s7 + $0xfc0] sm:$0xff]
  %v1038 = vld [vmem:[%s7 + $0xfc8] sm:$0xff]
  %v1039 = vld [vmem:[%s7 + $0xfd0] sm:$0xff]
  %v1040 = vld [vmem:[%s7 + $0xfd8] sm:$0xff]
  %v1041 = vld [vmem:[%s7 + $0xfe0] sm:$0xff]
  %v1042 = vld [vmem:[%s7 + $0xfe8] sm:$0xff]
  %v1043 = vld [vmem:[%s7 + $0xff0] sm:$0xff]
  %v1044 = vld [vmem:[%s7 + $0xff8] sm:$0xff]
  %v1045 = vld [vmem:[%s7 + $0x1000] sm:$0xff]
  %v1046 = vld [vmem:[%s7 + $0x1008] sm:$0xff]
  %v1047 = vld [vmem:[%s7 + $0x1010] sm:$0xff]
  %v1048 = vld [vmem:[%s7 + $0x1018] sm:$0xff]
  %v1049 = vld [vmem:[%s7 + $0x1020] sm:$0xff]
  %v1050 = vld [vmem:[%s7 + $0x1028] sm:$0xff]
  %v1051 = vld [vmem:[%s7 + $0x1030] sm:$0xff]
  %v1052 = vld [vmem:[%s7 + $0x1038] sm:$0xff]
  %v1053 = vld [vmem:[%s7 + $0x1040] sm:$0xff]
  %v1054 = vld [vmem:[%s7 + $0x1048] sm:$0xff]
  %v1055 = vld [vmem:[%s7 + $0x1050] sm:$0xff]
  %v1056 = vld [vmem:[%s7 + $0x1058] sm:$0xff]
  %v1057 = vld [vmem:[%s7 + $0x1060] sm:$0xff]
  %v1058 = vld [vmem:[%s7 + $0x1068] sm:$0xff]
  %v1059 = vld [vmem:[%s7 + $0x1070] sm:$0xff]
  %v1060 = vld [vmem:[%s7 + $0x1078] sm:$0xff]
  %v1061 = vld [vmem:[%s7 + $0x1080] sm:$0xff]
  %v1062 = vld [vmem:[%s7 + $0x1088] sm:$0xff]
  %v1063 = vld [vmem:[%s7 + $0x1090] sm:$0xff]
  %v1064 = vld [vmem:[%s7 + $0x1098] sm:$0xff]
  %v1065 = vld [vmem:[%s7 + $0x10a0] sm:$0xff]
  %v1066 = vld [vmem:[%s7 + $0x10a8] sm:$0xff]
  %v1067 = vld [vmem:[%s7 + $0x10b0] sm:$0xff]
  %v1068 = vld [vmem:[%s7 + $0x10b8] sm:$0xff]
  %v1069 = vld [vmem:[%s7 + $0x10c0] sm:$0xff]
  %v1070 = vld [vmem:[%s7 + $0x10c8] sm:$0xff]
  %v1071 = vld [vmem:[%s7 + $0x10d0] sm:$0xff]
  %v1072 = vld [vmem:[%s7 + $0x10d8] sm:$0xff]
  %v1073 = vld [vmem:[%s7 + $0x10e0] sm:$0xff]
  %v1074 = vld [vmem:[%s7 + $0x10e8] sm:$0xff]
  %v1075 = vld [vmem:[%s7 + $0x10f0] sm:$0xff]
  %v1076 = vld [vmem:[%s7 + $0x10f8] sm:$0xff]
  %v1077 = vld [vmem:[%s7 + $0x1100] sm:$0xff]
  %v1078 = vld [vmem:[%s7 + $0x1108] sm:$0xff]
  %v1079 = vld [vmem:[%s7 + $0x1110] sm:$0xff]
  %v1080 = vld [vmem:[%s7 + $0x1118] sm:$0xff]
  %v1081 = vld [vmem:[%s7 + $0x1120] sm:$0xff]
  %v1082 = vld [vmem:[%s7 + $0x1128] sm:$0xff]
  %v1083 = vld [vmem:[%s7 + $0x1130] sm:$0xff]
  %v1084 = vld [vmem:[%s7 + $0x1138] sm:$0xff]
  %v1085 = vld [vmem:[%s7 + $0x1140] sm:$0xff]
  %v1086 = vld [vmem:[%s7 + $0x1148] sm:$0xff]
  %v1087 = vld [vmem:[%s7 + $0x1150] sm:$0xff]
  %v1088 = vld [vmem:[%s7 + $0x1158] sm:$0xff]
  %v1089 = vld [vmem:[%s7 + $0x1160] sm:$0xff]
  %v1090 = vld [vmem:[%s7 + $0x1168] sm:$0xff]
  %v1091 = vld [vmem:[%s7 + $0x1170] sm:$0xff]
  %v1092 = vld [vmem:[%s7 + $0x1178] sm:$0xff]
  %v1093 = vld [vmem:[%s7 + $0x1180] sm:$0xff]
  %v1094 = vld [vmem:[%s7 + $0x1188] sm:$0xff]
  %v1095 = vld [vmem:[%s7 + $0x1190] sm:$0xff]
  %v1096 = vld [vmem:[%s7 + $0x1198] sm:$0xff]
  %v1097 = vld [vmem:[%s7 + $0x11a0] sm:$0xff]
  %v1098 = vld [vmem:[%s7 + $0x11a8] sm:$0xff]
  %v1099 = vld [vmem:[%s7 + $0x11b0] sm:$0xff]
  %v1100 = vld [vmem:[%s7 + $0x11b8] sm:$0xff]
  %v1101 = vld [vmem:[%s7 + $0x11c0] sm:$0xff]
  %v1102 = vld [vmem:[%s7 + $0x11c8] sm:$0xff]
  %v1103 = vld [vmem:[%s7 + $0x11d0] sm:$0xff]
  %v1104 = vld [vmem:[%s7 + $0x11d8] sm:$0xff]
  %v1105 = vld [vmem:[%s7 + $0x11e0] sm:$0xff]
  %v1106 = vld [vmem:[%s7 + $0x11e8] sm:$0xff]
  %v1107 = vld [vmem:[%s7 + $0x11f0] sm:$0xff]
  %v1108 = vld [vmem:[%s7 + $0x11f8] sm:$0xff]
  %v1109 = vld [vmem:[%s7 + $0x1200] sm:$0xff]
  %v1110 = vld [vmem:[%s7 + $0x1208] sm:$0xff]
  %v1111 = vld [vmem:[%s7 + $0x1210] sm:$0xff]
  %v1112 = vld [vmem:[%s7 + $0x1218] sm:$0xff]
  %v1113 = vld [vmem:[%s7 + $0x1220] sm:$0xff]
  %v1114 = vld [vmem:[%s7 + $0x1228] sm:$0xff]
  %v1115 = vld [vmem:[%s7 + $0x1230] sm:$0xff]
  %v1116 = vld [vmem:[%s7 + $0x1238] sm:$0xff]
  %v1117 = vld [vmem:[%s7 + $0x1240] sm:$0xff]
  %v1118 = vld [vmem:[%s7 + $0x1248] sm:$0xff]
  %v1119 = vld [vmem:[%s7 + $0x1250] sm:$0xff]
  %v1120 = vld [vmem:[%s7 + $0x1258] sm:$0xff]
  %v1121 = vld [vmem:[%s7 + $0x1260] sm:$0xff]
  %v1122 = vld [vmem:[%s7 + $0x1268] sm:$0xff]
  %v1123 = vld [vmem:[%s7 + $0x1270] sm:$0xff]
  %v1124 = vld [vmem:[%s7 + $0x1278] sm:$0xff]
  %v1125 = vld [vmem:[%s7 + $0x1280] sm:$0xff]
  %v1126 = vld [vmem:[%s7 + $0x1288] sm:$0xff]
  %v1127 = vld [vmem:[%s7 + $0x1290] sm:$0xff]
  %v1128 = vld [vmem:[%s7 + $0x1298] sm:$0xff]
  %v1129 = vld [vmem:[%s7 + $0x12a0] sm:$0xff]
  %v1130 = vld [vmem:[%s7 + $0x12a8] sm:$0xff]
  %v1131 = vld [vmem:[%s7 + $0x12b0] sm:$0xff]
  %v1132 = vld [vmem:[%s7 + $0x12b8] sm:$0xff]
  %v1133 = vld [vmem:[%s7 + $0x12c0] sm:$0xff]
  %v1134 = vld [vmem:[%s7 + $0x12c8] sm:$0xff]
  %v1135 = vld [vmem:[%s7 + $0x12d0] sm:$0xff]
  %v1136 = vld [vmem:[%s8] sm:$0xff]
  %v1137 = vld [vmem:[%s8 + $0x8] sm:$0x1]
  %v1140 = vlaneseq
  %v1141 = vshrl.u32 %v1140, 7
  %v1142 = vsub.s32 0, %v1141
  %v1143 = vrot.slane %v1136, %v1142
  %v1144 = vlaneseq
  %v1145 = vshrl.u32 %v1144, 7
  %v1146 = vsub.s32 1, %v1145
  %v1147 = vrot.slane %v1136, %v1146
  %v1148 = vlaneseq
  %v1149 = vshrl.u32 %v1148, 7
  %v1150 = vsub.s32 2, %v1149
  %v1151 = vrot.slane %v1136, %v1150
  %v1152 = vlaneseq
  %v1153 = vshrl.u32 %v1152, 7
  %v1154 = vsub.s32 3, %v1153
  %v1155 = vrot.slane %v1136, %v1154
  %v1156 = vlaneseq
  %v1157 = vshrl.u32 %v1156, 7
  %v1158 = vsub.s32 4, %v1157
  %v1159 = vrot.slane %v1136, %v1158
  %v1160 = vlaneseq
  %v1161 = vshrl.u32 %v1160, 7
  %v1162 = vsub.s32 5, %v1161
  %v1163 = vrot.slane %v1136, %v1162
  %v1164 = vlaneseq
  %v1165 = vshrl.u32 %v1164, 7
  %v1166 = vsub.s32 6, %v1165
  %v1167 = vrot.slane %v1136, %v1166
  %v1168 = vlaneseq
  %v1169 = vshrl.u32 %v1168, 7
  %v1170 = vsub.s32 7, %v1169
  %v1171 = vrot.slane %v1136, %v1170
  %v1172 = vlaneseq
  %v1173 = vshrl.u32 %v1172, 7
  %v1174 = vsub.s32 0, %v1173
  %v1175 = vrot.slane %v1137, %v1174
  %vm1185 = vcmask 195584
  %v1187 = vsel %vm1185, %v532, 0
  %1189 = vmatprep.subr.mxu0 %v534
  %1190 = vmatpush1.msra.mxu0 %v533
  %1191 = vmatprep.subr.mxu0 %v543
  %1192 = vmatpush1.msra.mxu0 %v542
  %1193 = vmatprep.subr.mxu0 %v552
  %1194 = vmatpush1.msra.mxu0 %v551
  %1195 = vmatprep.subr.mxu0 %v561
  %1196 = vmatpush1.msra.mxu0 %v560
  %1197 = vmatprep.subr.mxu0 %v570
  %1198 = vmatpush1.msra.mxu0 %v569
  %1199 = vmatprep.subr.mxu0 %v579
  %1200 = vmatpush1.msra.mxu0 %v578
  %1201 = vmatprep.subr.mxu0 %v588
  %1202 = vmatpush1.msra.mxu0 %v587
  %1203 = vmatprep.subr.mxu0 %v597
  %1204 = vmatpush1.msra.mxu0 %v596
  %1205 = vmatprep.subr.mxu0 %v606
  %1206 = vmatpush1.msra.mxu0 %v605
  %1207 = vmatprep.subr.mxu0 %v615
  %1208 = vmatpush1.msra.mxu0 %v614
  %1209 = vmatprep.subr.mxu0 %v624
  %1210 = vmatpush1.msra.mxu0 %v623
  %1211 = vmatprep.subr.mxu0 %v633
  %1212 = vmatpush1.msra.mxu0 %v632
  %1213 = vmatprep.subr.mxu0 %v642
  %1214 = vmatpush1.msra.mxu0 %v641
  %1215 = vmatprep.subr.mxu0 %v651
  %1216 = vmatpush1.msra.mxu0 %v650
  %1217 = vmatprep.subr.mxu0 %v660
  %1218 = vmatpush1.msra.mxu0 %v659
  %1219 = vmatprep.subr.mxu0 %v669
  %1220 = vmatpush1.msra.mxu0 %v668
  %1221 = vmatprep.subr.mxu0 %v678
  %1222 = vmatpush1.msra.mxu0 %v677
  %1223 = vmatprep.subr.mxu0 %v687
  %1224 = vmatpush1.msra.mxu0 %v686
  %1225 = vmatprep.subr.mxu0 %v696
  %1226 = vmatpush1.msra.mxu0 %v695
  %1227 = vmatprep.subr.mxu0 %v705
  %1228 = vmatpush1.msra.mxu0 %v704
  %1229 = vmatprep.subr.mxu0 %v714
  %1230 = vmatpush1.msra.mxu0 %v713
  %1231 = vmatprep.subr.mxu0 %v723
  %1232 = vmatpush1.msra.mxu0 %v722
  %1233 = vmatprep.subr.mxu0 %v732
  %1234 = vmatpush1.msra.mxu0 %v731
  %1235 = vmatprep.subr.mxu0 %v741
  %1236 = vmatpush1.msra.mxu0 %v740
  %1237 = vmatprep.subr.mxu0 %v750
  %1238 = vmatpush1.msra.mxu0 %v749
  %1239 = vmatprep.subr.mxu0 %v759
  %1240 = vmatpush1.msra.mxu0 %v758
  %1241 = vmatprep.subr.mxu0 %v768
  %1242 = vmatpush1.msra.mxu0 %v767
  %1243 = vmatprep.subr.mxu0 %v777
  %1244 = vmatpush1.msra.mxu0 %v776
  %1245 = vmatprep.subr.mxu0 %v786
  %1246 = vmatpush1.msra.mxu0 %v785
  %1247 = vmatprep.subr.mxu0 %v795
  %1248 = vmatpush1.msra.mxu0 %v794
  %1249 = vmatprep.subr.mxu0 %v804
  %1250 = vmatpush1.msra.mxu0 %v803
  %1251 = vmatprep.subr.mxu0 %v813
  %1252 = vmatpush1.msra.mxu0 %v812
  %1253 = vmatprep.mubr.f32.mxu0 %v529
  %1254 = vmatmul.mubr.f32.gmra.mrb[0].mxu0 %v528
  %v1255 = vpop.f32.mrb[0].mxu0
  %v1256 = vadd.f32 %v1143, %v1255
  %v1257 = vpop.f32.mrb[0].mxu0
  %v1258 = vadd.f32 %v1147, %v1257
  %1259 = vdwg.mxu0
  %1260 = vmatprep.subr.mxu0 %v822
  %1261 = vmatpush1.msra.mxu0 %v821
  %1262 = vmatprep.subr.mxu0 %v831
  %1263 = vmatpush1.msra.mxu0 %v830
  %1264 = vmatprep.subr.mxu0 %v840
  %1265 = vmatpush1.msra.mxu0 %v839
  %1266 = vmatprep.subr.mxu0 %v849
  %1267 = vmatpush1.msra.mxu0 %v848
  %1268 = vmatprep.subr.mxu0 %v858
  %1269 = vmatpush1.msra.mxu0 %v857
  %1270 = vmatprep.subr.mxu0 %v867
  %1271 = vmatpush1.msra.mxu0 %v866
  %1272 = vmatprep.subr.mxu0 %v876
  %1273 = vmatpush1.msra.mxu0 %v875
  %1274 = vmatprep.subr.mxu0 %v885
  %1275 = vmatpush1.msra.mxu0 %v884
  %1276 = vmatprep.subr.mxu0 %v894
  %1277 = vmatpush1.msra.mxu0 %v893
  %1278 = vmatprep.subr.mxu0 %v903
  %1279 = vmatpush1.msra.mxu0 %v902
  %1280 = vmatprep.subr.mxu0 %v912
  %1281 = vmatpush1.msra.mxu0 %v911
  %1282 = vmatprep.subr.mxu0 %v921
  %1283 = vmatpush1.msra.mxu0 %v920
  %1284 = vmatprep.subr.mxu0 %v930
  %1285 = vmatpush1.msra.mxu0 %v929
  %1286 = vmatprep.subr.mxu0 %v939
  %1287 = vmatpush1.msra.mxu0 %v938
  %1288 = vmatprep.subr.mxu0 %v948
  %1289 = vmatpush1.msra.mxu0 %v947
  %1290 = vmatprep.subr.mxu0 %v957
  %1291 = vmatpush1.msra.mxu0 %v956
  %1292 = vmatprep.subr.mxu0 %v966
  %1293 = vmatpush1.msra.mxu0 %v965
  %1294 = vmatprep.subr.mxu0 %v975
  %1295 = vmatpush1.msra.mxu0 %v974
  %1296 = vmatprep.subr.mxu0 %v984
  %1297 = vmatpush1.msra.mxu0 %v983
  %1298 = vmatprep.subr.mxu0 %v993
  %1299 = vmatpush1.msra.mxu0 %v992
  %1300 = vmatprep.subr.mxu0 %v1002
  %1301 = vmatpush1.msra.mxu0 %v1001
  %1302 = vmatprep.subr.mxu0 %v1011
  %1303 = vmatpush1.msra.mxu0 %v1010
  %1304 = vmatprep.subr.mxu0 %v1020
  %1305 = vmatpush1.msra.mxu0 %v1019
  %1306 = vmatprep.subr.mxu0 %v1029
  %1307 = vmatpush1.msra.mxu0 %v1028
  %1308 = vmatprep.subr.mxu0 %v1038
  %1309 = vmatpush1.msra.mxu0 %v1037
  %1310 = vmatprep.subr.mxu0 %v1047
  %1311 = vmatpush1.msra.mxu0 %v1046
  %1312 = vmatprep.subr.mxu0 %v1056
  %1313 = vmatpush1.msra.mxu0 %v1055
  %1314 = vmatprep.subr.mxu0 %v1065
  %1315 = vmatpush1.msra.mxu0 %v1064
  %1316 = vmatprep.subr.mxu0 %v1074
  %1317 = vmatpush1.msra.mxu0 %v1073
  %1318 = vmatprep.subr.mxu0 %v1083
  %1319 = vmatpush1.msra.mxu0 %v1082
  %1320 = vmatprep.subr.mxu0 %v1092
  %1321 = vmatpush1.msra.mxu0 %v1091
  %1322 = vmatprep.subr.mxu0 %v1101
  %1323 = vmatpush1.msra.mxu0 %v1100
  %1324 = vmatprep.mubr.f32.mxu0 %v531
  %1325 = vmatmul.mubr.f32.gmra.mrb[0].mxu0 %v530
  %v1326 = vpop.f32.mrb[0].mxu0
  %v1327 = vadd.f32 %v1256, %v1326
  %v1328 = vpop.f32.mrb[0].mxu0
  %v1329 = vadd.f32 %v1258, %v1328
  %1330 = vdwg.mxu0
  %1331 = vmatprep.subr.mxu0 %v1110
  %1332 = vmatpush1.msra.mxu0 %v1109
  %1333 = vmatprep.subr.mxu0 %v1119
  %1334 = vmatpush1.msra.mxu0 %v1118
  %1335 = vmatprep.subr.mxu0 %v1128
  %1336 = vmatpush1.msra.mxu0 %v1127
  %1337 = vmatprep.subr.mxu0 0.0
  %1338 = vmatpush1.msra.mxu0 0.0
  %1339 = vmatprep.subr.mxu0 0.0
  %1340 = vmatpush1.msra.mxu0 0.0
  %1341 = vmatprep.subr.mxu0 0.0
  %1342 = vmatpush1.msra.mxu0 0.0
  %1343 = vmatprep.subr.mxu0 0.0
  %1344 = vmatpush1.msra.mxu0 0.0
  %1345 = vmatprep.subr.mxu0 0.0
  %1346 = vmatpush1.msra.mxu0 0.0
  %1347 = vmatprep.subr.mxu0 0.0
  %1348 = vmatpush1.msra.mxu0 0.0
  %1349 = vmatprep.subr.mxu0 0.0
  %1350 = vmatpush1.msra.mxu0 0.0
  %1351 = vmatprep.subr.mxu0 0.0
  %1352 = vmatpush1.msra.mxu0 0.0
  %1353 = vmatprep.subr.mxu0 0.0
  %1354 = vmatpush1.msra.mxu0 0.0
  %1355 = vmatprep.subr.mxu0 0.0
  %1356 = vmatpush1.msra.mxu0 0.0
  %1357 = vmatprep.subr.mxu0 0.0
  %1358 = vmatpush1.msra.mxu0 0.0
  %1359 = vmatprep.subr.mxu0 0.0
  %1360 = vmatpush1.msra.mxu0 0.0
  %1361 = vmatprep.subr.mxu0 0.0
  %1362 = vmatpush1.msra.mxu0 0.0
  %1363 = vmatprep.subr.mxu0 0.0
  %1364 = vmatpush1.msra.mxu0 0.0
  %1365 = vmatprep.subr.mxu0 0.0
  %1366 = vmatpush1.msra.mxu0 0.0
  %1367 = vmatprep.subr.mxu0 0.0
  %1368 = vmatpush1.msra.mxu0 0.0
  %1369 = vmatprep.subr.mxu0 0.0
  %1370 = vmatpush1.msra.mxu0 0.0
  %1371 = vmatprep.subr.mxu0 0.0
  %1372 = vmatpush1.msra.mxu0 0.0
  %1373 = vmatprep.subr.mxu0 0.0
  %1374 = vmatpush1.msra.mxu0 0.0
  %1375 = vmatprep.subr.mxu0 0.0
  %1376 = vmatpush1.msra.mxu0 0.0
  %1377 = vmatprep.subr.mxu0 0.0
  %1378 = vmatpush1.msra.mxu0 0.0
  %1379 = vmatprep.subr.mxu0 0.0
  %1380 = vmatpush1.msra.mxu0 0.0
  %1381 = vmatprep.subr.mxu0 0.0
  %1382 = vmatpush1.msra.mxu0 0.0
  %1383 = vmatprep.subr.mxu0 0.0
  %1384 = vmatpush1.msra.mxu0 0.0
  %1385 = vmatprep.subr.mxu0 0.0
  %1386 = vmatpush1.msra.mxu0 0.0
  %1387 = vmatprep.subr.mxu0 0.0
  %1388 = vmatpush1.msra.mxu0 0.0
  %1389 = vmatprep.subr.mxu0 0.0
  %1390 = vmatpush1.msra.mxu0 0.0
  %1391 = vmatprep.subr.mxu0 0.0
  %1392 = vmatpush1.msra.mxu0 0.0
  %1393 = vmatprep.subr.mxu0 0.0
  %1394 = vmatpush1.msra.mxu0 0.0
  %1395 = vmatprep.mubr.f32.mxu0 0.0
  %1396 = vmatmul.mubr.f32.gmra.mrb[0].mxu0 %v1187
  %v1397 = vpop.f32.mrb[0].mxu0
  %v1398 = vadd.f32 %v1327, %v1397
  %v1399 = vpop.f32.mrb[0].mxu0
  %v1400 = vadd.f32 %v1329, %v1399
  %1401 = vdwg.mxu0
  %1402 = vmatprep.subr.mxu0 %v536
  %1403 = vmatpush1.msra.mxu0 %v535
  %1404 = vmatprep.subr.mxu0 %v545
  %1405 = vmatpush1.msra.mxu0 %v544
  %1406 = vmatprep.subr.mxu0 %v554
  %1407 = vmatpush1.msra.mxu0 %v553
  %1408 = vmatprep.subr.mxu0 %v563
  %1409 = vmatpush1.msra.mxu0 %v562
  %1410 = vmatprep.subr.mxu0 %v572
  %1411 = vmatpush1.msra.mxu0 %v571
  %1412 = vmatprep.subr.mxu0 %v581
  %1413 = vmatpush1.msra.mxu0 %v580
  %1414 = vmatprep.subr.mxu0 %v590
  %1415 = vmatpush1.msra.mxu0 %v589
  %1416 = vmatprep.subr.mxu0 %v599
  %1417 = vmatpush1.msra.mxu0 %v598
  %1418 = vmatprep.subr.mxu0 %v608
  %1419 = vmatpush1.msra.mxu0 %v607
  %1420 = vmatprep.subr.mxu0 %v617
  %1421 = vmatpush1.msra.mxu0 %v616
  %1422 = vmatprep.subr.mxu0 %v626
  %1423 = vmatpush1.msra.mxu0 %v625
  %1424 = vmatprep.subr.mxu0 %v635
  %1425 = vmatpush1.msra.mxu0 %v634
  %1426 = vmatprep.subr.mxu0 %v644
  %1427 = vmatpush1.msra.mxu0 %v643
  %1428 = vmatprep.subr.mxu0 %v653
  %1429 = vmatpush1.msra.mxu0 %v652
  %1430 = vmatprep.subr.mxu0 %v662
  %1431 = vmatpush1.msra.mxu0 %v661
  %1432 = vmatprep.subr.mxu0 %v671
  %1433 = vmatpush1.msra.mxu0 %v670
  %1434 = vmatprep.subr.mxu0 %v680
  %1435 = vmatpush1.msra.mxu0 %v679
  %1436 = vmatprep.subr.mxu0 %v689
  %1437 = vmatpush1.msra.mxu0 %v688
  %1438 = vmatprep.subr.mxu0 %v698
  %1439 = vmatpush1.msra.mxu0 %v697
  %1440 = vmatprep.subr.mxu0 %v707
  %1441 = vmatpush1.msra.mxu0 %v706
  %1442 = vmatprep.subr.mxu0 %v716
  %1443 = vmatpush1.msra.mxu0 %v715
  %1444 = vmatprep.subr.mxu0 %v725
  %1445 = vmatpush1.msra.mxu0 %v724
  %1446 = vmatprep.subr.mxu0 %v734
  %1447 = vmatpush1.msra.mxu0 %v733
  %1448 = vmatprep.subr.mxu0 %v743
  %1449 = vmatpush1.msra.mxu0 %v742
  %1450 = vmatprep.subr.mxu0 %v752
  %1451 = vmatpush1.msra.mxu0 %v751
  %1452 = vmatprep.subr.mxu0 %v761
  %1453 = vmatpush1.msra.mxu0 %v760
  %1454 = vmatprep.subr.mxu0 %v770
  %1455 = vmatpush1.msra.mxu0 %v769
  %1456 = vmatprep.subr.mxu0 %v779
  %1457 = vmatpush1.msra.mxu0 %v778
  %1458 = vmatprep.subr.mxu0 %v788
  %1459 = vmatpush1.msra.mxu0 %v787
  %1460 = vmatprep.subr.mxu0 %v797
  %1461 = vmatpush1.msra.mxu0 %v796
  %1462 = vmatprep.subr.mxu0 %v806
  %1463 = vmatpush1.msra.mxu0 %v805
  %1464 = vmatprep.subr.mxu0 %v815
  %1465 = vmatpush1.msra.mxu0 %v814
  %1466 = vmatprep.mubr.f32.mxu0 %v529
  %1467 = vmatmul.mubr.f32.gmra.mrb[0].mxu0 %v528
  %v1468 = vpop.f32.mrb[0].mxu0
  %v1469 = vadd.f32 %v1151, %v1468
  %v1470 = vpop.f32.mrb[0].mxu0
  %v1471 = vadd.f32 %v1155, %v1470
  %1472 = vdwg.mxu0
  %1473 = vmatprep.subr.mxu0 %v824
  %1474 = vmatpush1.msra.mxu0 %v823
  %1475 = vmatprep.subr.mxu0 %v833
  %1476 = vmatpush1.msra.mxu0 %v832
  %1477 = vmatprep.subr.mxu0 %v842
  %1478 = vmatpush1.msra.mxu0 %v841
  %1479 = vmatprep.subr.mxu0 %v851
  %1480 = vmatpush1.msra.mxu0 %v850
  %1481 = vmatprep.subr.mxu0 %v860
  %1482 = vmatpush1.msra.mxu0 %v859
  %1483 = vmatprep.subr.mxu0 %v869
  %1484 = vmatpush1.msra.mxu0 %v868
  %1485 = vmatprep.subr.mxu0 %v878
  %1486 = vmatpush1.msra.mxu0 %v877
  %1487 = vmatprep.subr.mxu0 %v887
  %1488 = vmatpush1.msra.mxu0 %v886
  %1489 = vmatprep.subr.mxu0 %v896
  %1490 = vmatpush1.msra.mxu0 %v895
  %1491 = vmatprep.subr.mxu0 %v905
  %1492 = vmatpush1.msra.mxu0 %v904
  %1493 = vmatprep.subr.mxu0 %v914
  %1494 = vmatpush1.msra.mxu0 %v913
  %1495 = vmatprep.subr.mxu0 %v923
  %1496 = vmatpush1.msra.mxu0 %v922
  %1497 = vmatprep.subr.mxu0 %v932
  %1498 = vmatpush1.msra.mxu0 %v931
  %1499 = vmatprep.subr.mxu0 %v941
  %1500 = vmatpush1.msra.mxu0 %v940
  %1501 = vmatprep.subr.mxu0 %v950
  %1502 = vmatpush1.msra.mxu0 %v949
  %1503 = vmatprep.subr.mxu0 %v959
  %1504 = vmatpush1.msra.mxu0 %v958
  %1505 = vmatprep.subr.mxu0 %v968
  %1506 = vmatpush1.msra.mxu0 %v967
  %1507 = vmatprep.subr.mxu0 %v977
  %1508 = vmatpush1.msra.mxu0 %v976
  %1509 = vmatprep.subr.mxu0 %v986
  %1510 = vmatpush1.msra.mxu0 %v985
  %1511 = vmatprep.subr.mxu0 %v995
  %1512 = vmatpush1.msra.mxu0 %v994
  %1513 = vmatprep.subr.mxu0 %v1004
  %1514 = vmatpush1.msra.mxu0 %v1003
  %1515 = vmatprep.subr.mxu0 %v1013
  %1516 = vmatpush1.msra.mxu0 %v1012
  %1517 = vmatprep.subr.mxu0 %v1022
  %1518 = vmatpush1.msra.mxu0 %v1021
  %1519 = vmatprep.subr.mxu0 %v1031
  %1520 = vmatpush1.msra.mxu0 %v1030
  %1521 = vmatprep.subr.mxu0 %v1040
  %1522 = vmatpush1.msra.mxu0 %v1039
  %1523 = vmatprep.subr.mxu0 %v1049
  %1524 = vmatpush1.msra.mxu0 %v1048
  %1525 = vmatprep.subr.mxu0 %v1058
  %1526 = vmatpush1.msra.mxu0 %v1057
  %1527 = vmatprep.subr.mxu0 %v1067
  %1528 = vmatpush1.msra.mxu0 %v1066
  %1529 = vmatprep.subr.mxu0 %v1076
  %1530 = vmatpush1.msra.mxu0 %v1075
  %1531 = vmatprep.subr.mxu0 %v1085
  %1532 = vmatpush1.msra.mxu0 %v1084
  %1533 = vmatprep.subr.mxu0 %v1094
  %1534 = vmatpush1.msra.mxu0 %v1093
  %1535 = vmatprep.subr.mxu0 %v1103
  %1536 = vmatpush1.msra.mxu0 %v1102
  %1537 = vmatprep.mubr.f32.mxu0 %v531
  %1538 = vmatmul.mubr.f32.gmra.mrb[0].mxu0 %v530
  %v1539 = vpop.f32.mrb[0].mxu0
  %v1540 = vadd.f32 %v1469, %v1539
  %v1541 = vpop.f32.mrb[0].mxu0
  %v1542 = vadd.f32 %v1471, %v1541
  %1543 = vdwg.mxu0
  %1544 = vmatprep.subr.mxu0 %v1112
  %1545 = vmatpush1.msra.mxu0 %v1111
  %1546 = vmatprep.subr.mxu0 %v1121
  %1547 = vmatpush1.msra.mxu0 %v1120
  %1548 = vmatprep.subr.mxu0 %v1130
  %1549 = vmatpush1.msra.mxu0 %v1129
  %1550 = vmatprep.subr.mxu0 0.0
  %1551 = vmatpush1.msra.mxu0 0.0
  %1552 = vmatprep.subr.mxu0 0.0
  %1553 = vmatpush1.msra.mxu0 0.0
  %1554 = vmatprep.subr.mxu0 0.0
  %1555 = vmatpush1.msra.mxu0 0.0
  %1556 = vmatprep.subr.mxu0 0.0
  %1557 = vmatpush1.msra.mxu0 0.0
  %1558 = vmatprep.subr.mxu0 0.0
  %1559 = vmatpush1.msra.mxu0 0.0
  %1560 = vmatprep.subr.mxu0 0.0
  %1561 = vmatpush1.msra.mxu0 0.0
  %1562 = vmatprep.subr.mxu0 0.0
  %1563 = vmatpush1.msra.mxu0 0.0
  %1564 = vmatprep.subr.mxu0 0.0
  %1565 = vmatpush1.msra.mxu0 0.0
  %1566 = vmatprep.subr.mxu0 0.0
  %1567 = vmatpush1.msra.mxu0 0.0
  %1568 = vmatprep.subr.mxu0 0.0
  %1569 = vmatpush1.msra.mxu0 0.0
  %1570 = vmatprep.subr.mxu0 0.0
  %1571 = vmatpush1.msra.mxu0 0.0
  %1572 = vmatprep.subr.mxu0 0.0
  %1573 = vmatpush1.msra.mxu0 0.0
  %1574 = vmatprep.subr.mxu0 0.0
  %1575 = vmatpush1.msra.mxu0 0.0
  %1576 = vmatprep.subr.mxu0 0.0
  %1577 = vmatpush1.msra.mxu0 0.0
  %1578 = vmatprep.subr.mxu0 0.0
  %1579 = vmatpush1.msra.mxu0 0.0
  %1580 = vmatprep.subr.mxu0 0.0
  %1581 = vmatpush1.msra.mxu0 0.0
  %1582 = vmatprep.subr.mxu0 0.0
  %1583 = vmatpush1.msra.mxu0 0.0
  %1584 = vmatprep.subr.mxu0 0.0
  %1585 = vmatpush1.msra.mxu0 0.0
  %1586 = vmatprep.subr.mxu0 0.0
  %1587 = vmatpush1.msra.mxu0 0.0
  %1588 = vmatprep.subr.mxu0 0.0
  %1589 = vmatpush1.msra.mxu0 0.0
  %1590 = vmatprep.subr.mxu0 0.0
  %1591 = vmatpush1.msra.mxu0 0.0
  %1592 = vmatprep.subr.mxu0 0.0
  %1593 = vmatpush1.msra.mxu0 0.0
  %1594 = vmatprep.subr.mxu0 0.0
  %1595 = vmatpush1.msra.mxu0 0.0
  %1596 = vmatprep.subr.mxu0 0.0
  %1597 = vmatpush1.msra.mxu0 0.0
  %1598 = vmatprep.subr.mxu0 0.0
  %1599 = vmatpush1.msra.mxu0 0.0
  %1600 = vmatprep.subr.mxu0 0.0
  %1601 = vmatpush1.msra.mxu0 0.0
  %1602 = vmatprep.subr.mxu0 0.0
  %1603 = vmatpush1.msra.mxu0 0.0
  %1604 = vmatprep.subr.mxu0 0.0
  %1605 = vmatpush1.msra.mxu0 0.0
  %1606 = vmatprep.subr.mxu0 0.0
  %1607 = vmatpush1.msra.mxu0 0.0
  %1608 = vmatprep.mubr.f32.mxu0 0.0
  %1609 = vmatmul.mubr.f32.gmra.mrb[0].mxu0 %v1187
  %v1610 = vpop.f32.mrb[0].mxu0
  %v1611 = vadd.f32 %v1540, %v1610
  %v1612 = vpop.f32.mrb[0].mxu0
  %v1613 = vadd.f32 %v1542, %v1612
  %1614 = vdwg.mxu0
  %1615 = vmatprep.subr.mxu0 %v538
  %1616 = vmatpush1.msra.mxu0 %v537
  %1617 = vmatprep.subr.mxu0 %v547
  %1618 = vmatpush1.msra.mxu0 %v546
  %1619 = vmatprep.subr.mxu0 %v556
  %1620 = vmatpush1.msra.mxu0 %v555
  %1621 = vmatprep.subr.mxu0 %v565
  %1622 = vmatpush1.msra.mxu0 %v564
  %1623 = vmatprep.subr.mxu0 %v574
  %1624 = vmatpush1.msra.mxu0 %v573
  %1625 = vmatprep.subr.mxu0 %v583
  %1626 = vmatpush1.msra.mxu0 %v582
  %1627 = vmatprep.subr.mxu0 %v592
  %1628 = vmatpush1.msra.mxu0 %v591
  %1629 = vmatprep.subr.mxu0 %v601
  %1630 = vmatpush1.msra.mxu0 %v600
  %1631 = vmatprep.subr.mxu0 %v610
  %1632 = vmatpush1.msra.mxu0 %v609
  %1633 = vmatprep.subr.mxu0 %v619
  %1634 = vmatpush1.msra.mxu0 %v618
  %1635 = vmatprep.subr.mxu0 %v628
  %1636 = vmatpush1.msra.mxu0 %v627
  %1637 = vmatprep.subr.mxu0 %v637
  %1638 = vmatpush1.msra.mxu0 %v636
  %1639 = vmatprep.subr.mxu0 %v646
  %1640 = vmatpush1.msra.mxu0 %v645
  %1641 = vmatprep.subr.mxu0 %v655
  %1642 = vmatpush1.msra.mxu0 %v654
  %1643 = vmatprep.subr.mxu0 %v664
  %1644 = vmatpush1.msra.mxu0 %v663
  %1645 = vmatprep.subr.mxu0 %v673
  %1646 = vmatpush1.msra.mxu0 %v672
  %1647 = vmatprep.subr.mxu0 %v682
  %1648 = vmatpush1.msra.mxu0 %v681
  %1649 = vmatprep.subr.mxu0 %v691
  %1650 = vmatpush1.msra.mxu0 %v690
  %1651 = vmatprep.subr.mxu0 %v700
  %1652 = vmatpush1.msra.mxu0 %v699
  %1653 = vmatprep.subr.mxu0 %v709
  %1654 = vmatpush1.msra.mxu0 %v708
  %1655 = vmatprep.subr.mxu0 %v718
  %1656 = vmatpush1.msra.mxu0 %v717
  %1657 = vmatprep.subr.mxu0 %v727
  %1658 = vmatpush1.msra.mxu0 %v726
  %1659 = vmatprep.subr.mxu0 %v736
  %1660 = vmatpush1.msra.mxu0 %v735
  %1661 = vmatprep.subr.mxu0 %v745
  %1662 = vmatpush1.msra.mxu0 %v744
  %1663 = vmatprep.subr.mxu0 %v754
  %1664 = vmatpush1.msra.mxu0 %v753
  %1665 = vmatprep.subr.mxu0 %v763
  %1666 = vmatpush1.msra.mxu0 %v762
  %1667 = vmatprep.subr.mxu0 %v772
  %1668 = vmatpush1.msra.mxu0 %v771
  %1669 = vmatprep.subr.mxu0 %v781
  %1670 = vmatpush1.msra.mxu0 %v780
  %1671 = vmatprep.subr.mxu0 %v790
  %1672 = vmatpush1.msra.mxu0 %v789
  %1673 = vmatprep.subr.mxu0 %v799
  %1674 = vmatpush1.msra.mxu0 %v798
  %1675 = vmatprep.subr.mxu0 %v808
  %1676 = vmatpush1.msra.mxu0 %v807
  %1677 = vmatprep.subr.mxu0 %v817
  %1678 = vmatpush1.msra.mxu0 %v816
  %1679 = vmatprep.mubr.f32.mxu0 %v529
  %1680 = vmatmul.mubr.f32.gmra.mrb[0].mxu0 %v528
  %v1681 = vpop.f32.mrb[0].mxu0
  %v1682 = vadd.f32 %v1159, %v1681
  %v1683 = vpop.f32.mrb[0].mxu0
  %v1684 = vadd.f32 %v1163, %v1683
  %1685 = vdwg.mxu0
  %1686 = vmatprep.subr.mxu0 %v826
  %1687 = vmatpush1.msra.mxu0 %v825
  %1688 = vmatprep.subr.mxu0 %v835
  %1689 = vmatpush1.msra.mxu0 %v834
  %1690 = vmatprep.subr.mxu0 %v844
  %1691 = vmatpush1.msra.mxu0 %v843
  %1692 = vmatprep.subr.mxu0 %v853
  %1693 = vmatpush1.msra.mxu0 %v852
  %1694 = vmatprep.subr.mxu0 %v862
  %1695 = vmatpush1.msra.mxu0 %v861
  %1696 = vmatprep.subr.mxu0 %v871
  %1697 = vmatpush1.msra.mxu0 %v870
  %1698 = vmatprep.subr.mxu0 %v880
  %1699 = vmatpush1.msra.mxu0 %v879
  %1700 = vmatprep.subr.mxu0 %v889
  %1701 = vmatpush1.msra.mxu0 %v888
  %1702 = vmatprep.subr.mxu0 %v898
  %1703 = vmatpush1.msra.mxu0 %v897
  %1704 = vmatprep.subr.mxu0 %v907
  %1705 = vmatpush1.msra.mxu0 %v906
  %1706 = vmatprep.subr.mxu0 %v916
  %1707 = vmatpush1.msra.mxu0 %v915
  %1708 = vmatprep.subr.mxu0 %v925
  %1709 = vmatpush1.msra.mxu0 %v924
  %1710 = vmatprep.subr.mxu0 %v934
  %1711 = vmatpush1.msra.mxu0 %v933
  %1712 = vmatprep.subr.mxu0 %v943
  %1713 = vmatpush1.msra.mxu0 %v942
  %1714 = vmatprep.subr.mxu0 %v952
  %1715 = vmatpush1.msra.mxu0 %v951
  %1716 = vmatprep.subr.mxu0 %v961
  %1717 = vmatpush1.msra.mxu0 %v960
  %1718 = vmatprep.subr.mxu0 %v970
  %1719 = vmatpush1.msra.mxu0 %v969
  %1720 = vmatprep.subr.mxu0 %v979
  %1721 = vmatpush1.msra.mxu0 %v978
  %1722 = vmatprep.subr.mxu0 %v988
  %1723 = vmatpush1.msra.mxu0 %v987
  %1724 = vmatprep.subr.mxu0 %v997
  %1725 = vmatpush1.msra.mxu0 %v996
  %1726 = vmatprep.subr.mxu0 %v1006
  %1727 = vmatpush1.msra.mxu0 %v1005
  %1728 = vmatprep.subr.mxu0 %v1015
  %1729 = vmatpush1.msra.mxu0 %v1014
  %1730 = vmatprep.subr.mxu0 %v1024
  %1731 = vmatpush1.msra.mxu0 %v1023
  %1732 = vmatprep.subr.mxu0 %v1033
  %1733 = vmatpush1.msra.mxu0 %v1032
  %1734 = vmatprep.subr.mxu0 %v1042
  %1735 = vmatpush1.msra.mxu0 %v1041
  %1736 = vmatprep.subr.mxu0 %v1051
  %1737 = vmatpush1.msra.mxu0 %v1050
  %1738 = vmatprep.subr.mxu0 %v1060
  %1739 = vmatpush1.msra.mxu0 %v1059
  %1740 = vmatprep.subr.mxu0 %v1069
  %1741 = vmatpush1.msra.mxu0 %v1068
  %1742 = vmatprep.subr.mxu0 %v1078
  %1743 = vmatpush1.msra.mxu0 %v1077
  %1744 = vmatprep.subr.mxu0 %v1087
  %1745 = vmatpush1.msra.mxu0 %v1086
  %1746 = vmatprep.subr.mxu0 %v1096
  %1747 = vmatpush1.msra.mxu0 %v1095
  %1748 = vmatprep.subr.mxu0 %v1105
  %1749 = vmatpush1.msra.mxu0 %v1104
  %1750 = vmatprep.mubr.f32.mxu0 %v531
  %1751 = vmatmul.mubr.f32.gmra.mrb[0].mxu0 %v530
  %v1752 = vpop.f32.mrb[0].mxu0
  %v1753 = vadd.f32 %v1682, %v1752
  %v1754 = vpop.f32.mrb[0].mxu0
  %v1755 = vadd.f32 %v1684, %v1754
  %1756 = vdwg.mxu0
  %1757 = vmatprep.subr.mxu0 %v1114
  %1758 = vmatpush1.msra.mxu0 %v1113
  %1759 = vmatprep.subr.mxu0 %v1123
  %1760 = vmatpush1.msra.mxu0 %v1122
  %1761 = vmatprep.subr.mxu0 %v1132
  %1762 = vmatpush1.msra.mxu0 %v1131
  %1763 = vmatprep.subr.mxu0 0.0
  %1764 = vmatpush1.msra.mxu0 0.0
  %1765 = vmatprep.subr.mxu0 0.0
  %1766 = vmatpush1.msra.mxu0 0.0
  %1767 = vmatprep.subr.mxu0 0.0
  %1768 = vmatpush1.msra.mxu0 0.0
  %1769 = vmatprep.subr.mxu0 0.0
  %1770 = vmatpush1.msra.mxu0 0.0
  %1771 = vmatprep.subr.mxu0 0.0
  %1772 = vmatpush1.msra.mxu0 0.0
  %1773 = vmatprep.subr.mxu0 0.0
  %1774 = vmatpush1.msra.mxu0 0.0
  %1775 = vmatprep.subr.mxu0 0.0
  %1776 = vmatpush1.msra.mxu0 0.0
  %1777 = vmatprep.subr.mxu0 0.0
  %1778 = vmatpush1.msra.mxu0 0.0
  %1779 = vmatprep.subr.mxu0 0.0
  %1780 = vmatpush1.msra.mxu0 0.0
  %1781 = vmatprep.subr.mxu0 0.0
  %1782 = vmatpush1.msra.mxu0 0.0
  %1783 = vmatprep.subr.mxu0 0.0
  %1784 = vmatpush1.msra.mxu0 0.0
  %1785 = vmatprep.subr.mxu0 0.0
  %1786 = vmatpush1.msra.mxu0 0.0
  %1787 = vmatprep.subr.mxu0 0.0
  %1788 = vmatpush1.msra.mxu0 0.0
  %1789 = vmatprep.subr.mxu0 0.0
  %1790 = vmatpush1.msra.mxu0 0.0
  %1791 = vmatprep.subr.mxu0 0.0
  %1792 = vmatpush1.msra.mxu0 0.0
  %1793 = vmatprep.subr.mxu0 0.0
  %1794 = vmatpush1.msra.mxu0 0.0
  %1795 = vmatprep.subr.mxu0 0.0
  %1796 = vmatpush1.msra.mxu0 0.0
  %1797 = vmatprep.subr.mxu0 0.0
  %1798 = vmatpush1.msra.mxu0 0.0
  %1799 = vmatprep.subr.mxu0 0.0
  %1800 = vmatpush1.msra.mxu0 0.0
  %1801 = vmatprep.subr.mxu0 0.0
  %1802 = vmatpush1.msra.mxu0 0.0
  %1803 = vmatprep.subr.mxu0 0.0
  %1804 = vmatpush1.msra.mxu0 0.0
  %1805 = vmatprep.subr.mxu0 0.0
  %1806 = vmatpush1.msra.mxu0 0.0
  %1807 = vmatprep.subr.mxu0 0.0
  %1808 = vmatpush1.msra.mxu0 0.0
  %1809 = vmatprep.subr.mxu0 0.0
  %1810 = vmatpush1.msra.mxu0 0.0
  %1811 = vmatprep.subr.mxu0 0.0
  %1812 = vmatpush1.msra.mxu0 0.0
  %1813 = vmatprep.subr.mxu0 0.0
  %1814 = vmatpush1.msra.mxu0 0.0
  %1815 = vmatprep.subr.mxu0 0.0
  %1816 = vmatpush1.msra.mxu0 0.0
  %1817 = vmatprep.subr.mxu0 0.0
  %1818 = vmatpush1.msra.mxu0 0.0
  %1819 = vmatprep.subr.mxu0 0.0
  %1820 = vmatpush1.msra.mxu0 0.0
  %1821 = vmatprep.mubr.f32.mxu0 0.0
  %1822 = vmatmul.mubr.f32.gmra.mrb[0].mxu0 %v1187
  %v1823 = vpop.f32.mrb[0].mxu0
  %v1824 = vadd.f32 %v1753, %v1823
  %v1825 = vpop.f32.mrb[0].mxu0
  %v1826 = vadd.f32 %v1755, %v1825
  %1827 = vdwg.mxu0
  %1828 = vmatprep.subr.mxu0 %v540
  %1829 = vmatpush1.msra.mxu0 %v539
  %1830 = vmatprep.subr.mxu0 %v549
  %1831 = vmatpush1.msra.mxu0 %v548
  %1832 = vmatprep.subr.mxu0 %v558
  %1833 = vmatpush1.msra.mxu0 %v557
  %1834 = vmatprep.subr.mxu0 %v567
  %1835 = vmatpush1.msra.mxu0 %v566
  %1836 = vmatprep.subr.mxu0 %v576
  %1837 = vmatpush1.msra.mxu0 %v575
  %1838 = vmatprep.subr.mxu0 %v585
  %1839 = vmatpush1.msra.mxu0 %v584
  %1840 = vmatprep.subr.mxu0 %v594
  %1841 = vmatpush1.msra.mxu0 %v593
  %1842 = vmatprep.subr.mxu0 %v603
  %1843 = vmatpush1.msra.mxu0 %v602
  %1844 = vmatprep.subr.mxu0 %v612
  %1845 = vmatpush1.msra.mxu0 %v611
  %1846 = vmatprep.subr.mxu0 %v621
  %1847 = vmatpush1.msra.mxu0 %v620
  %1848 = vmatprep.subr.mxu0 %v630
  %1849 = vmatpush1.msra.mxu0 %v629
  %1850 = vmatprep.subr.mxu0 %v639
  %1851 = vmatpush1.msra.mxu0 %v638
  %1852 = vmatprep.subr.mxu0 %v648
  %1853 = vmatpush1.msra.mxu0 %v647
  %1854 = vmatprep.subr.mxu0 %v657
  %1855 = vmatpush1.msra.mxu0 %v656
  %1856 = vmatprep.subr.mxu0 %v666
  %1857 = vmatpush1.msra.mxu0 %v665
  %1858 = vmatprep.subr.mxu0 %v675
  %1859 = vmatpush1.msra.mxu0 %v674
  %1860 = vmatprep.subr.mxu0 %v684
  %1861 = vmatpush1.msra.mxu0 %v683
  %1862 = vmatprep.subr.mxu0 %v693
  %1863 = vmatpush1.msra.mxu0 %v692
  %1864 = vmatprep.subr.mxu0 %v702
  %1865 = vmatpush1.msra.mxu0 %v701
  %1866 = vmatprep.subr.mxu0 %v711
  %1867 = vmatpush1.msra.mxu0 %v710
  %1868 = vmatprep.subr.mxu0 %v720
  %1869 = vmatpush1.msra.mxu0 %v719
  %1870 = vmatprep.subr.mxu0 %v729
  %1871 = vmatpush1.msra.mxu0 %v728
  %1872 = vmatprep.subr.mxu0 %v738
  %1873 = vmatpush1.msra.mxu0 %v737
  %1874 = vmatprep.subr.mxu0 %v747
  %1875 = vmatpush1.msra.mxu0 %v746
  %1876 = vmatprep.subr.mxu0 %v756
  %1877 = vmatpush1.msra.mxu0 %v755
  %1878 = vmatprep.subr.mxu0 %v765
  %1879 = vmatpush1.msra.mxu0 %v764
  %1880 = vmatprep.subr.mxu0 %v774
  %1881 = vmatpush1.msra.mxu0 %v773
  %1882 = vmatprep.subr.mxu0 %v783
  %1883 = vmatpush1.msra.mxu0 %v782
  %1884 = vmatprep.subr.mxu0 %v792
  %1885 = vmatpush1.msra.mxu0 %v791
  %1886 = vmatprep.subr.mxu0 %v801
  %1887 = vmatpush1.msra.mxu0 %v800
  %1888 = vmatprep.subr.mxu0 %v810
  %1889 = vmatpush1.msra.mxu0 %v809
  %1890 = vmatprep.subr.mxu0 %v819
  %1891 = vmatpush1.msra.mxu0 %v818
  %1892 = vmatprep.mubr.f32.mxu0 %v529
  %1893 = vmatmul.mubr.f32.gmra.mrb[0].mxu0 %v528
  %v1894 = vpop.f32.mrb[0].mxu0
  %v1895 = vadd.f32 %v1167, %v1894
  %v1896 = vpop.f32.mrb[0].mxu0
  %v1897 = vadd.f32 %v1171, %v1896
  %1898 = vdwg.mxu0
  %1899 = vmatprep.subr.mxu0 %v828
  %1900 = vmatpush1.msra.mxu0 %v827
  %1901 = vmatprep.subr.mxu0 %v837
  %1902 = vmatpush1.msra.mxu0 %v836
  %1903 = vmatprep.subr.mxu0 %v846
  %1904 = vmatpush1.msra.mxu0 %v845
  %1905 = vmatprep.subr.mxu0 %v855
  %1906 = vmatpush1.msra.mxu0 %v854
  %1907 = vmatprep.subr.mxu0 %v864
  %1908 = vmatpush1.msra.mxu0 %v863
  %1909 = vmatprep.subr.mxu0 %v873
  %1910 = vmatpush1.msra.mxu0 %v872
  %1911 = vmatprep.subr.mxu0 %v882
  %1912 = vmatpush1.msra.mxu0 %v881
  %1913 = vmatprep.subr.mxu0 %v891
  %1914 = vmatpush1.msra.mxu0 %v890
  %1915 = vmatprep.subr.mxu0 %v900
  %1916 = vmatpush1.msra.mxu0 %v899
  %1917 = vmatprep.subr.mxu0 %v909
  %1918 = vmatpush1.msra.mxu0 %v908
  %1919 = vmatprep.subr.mxu0 %v918
  %1920 = vmatpush1.msra.mxu0 %v917
  %1921 = vmatprep.subr.mxu0 %v927
  %1922 = vmatpush1.msra.mxu0 %v926
  %1923 = vmatprep.subr.mxu0 %v936
  %1924 = vmatpush1.msra.mxu0 %v935
  %1925 = vmatprep.subr.mxu0 %v945
  %1926 = vmatpush1.msra.mxu0 %v944
  %1927 = vmatprep.subr.mxu0 %v954
  %1928 = vmatpush1.msra.mxu0 %v953
  %1929 = vmatprep.subr.mxu0 %v963
  %1930 = vmatpush1.msra.mxu0 %v962
  %1931 = vmatprep.subr.mxu0 %v972
  %1932 = vmatpush1.msra.mxu0 %v971
  %1933 = vmatprep.subr.mxu0 %v981
  %1934 = vmatpush1.msra.mxu0 %v980
  %1935 = vmatprep.subr.mxu0 %v990
  %1936 = vmatpush1.msra.mxu0 %v989
  %1937 = vmatprep.subr.mxu0 %v999
  %1938 = vmatpush1.msra.mxu0 %v998
  %1939 = vmatprep.subr.mxu0 %v1008
  %1940 = vmatpush1.msra.mxu0 %v1007
  %1941 = vmatprep.subr.mxu0 %v1017
  %1942 = vmatpush1.msra.mxu0 %v1016
  %1943 = vmatprep.subr.mxu0 %v1026
  %1944 = vmatpush1.msra.mxu0 %v1025
  %1945 = vmatprep.subr.mxu0 %v1035
  %1946 = vmatpush1.msra.mxu0 %v1034
  %1947 = vmatprep.subr.mxu0 %v1044
  %1948 = vmatpush1.msra.mxu0 %v1043
  %1949 = vmatprep.subr.mxu0 %v1053
  %1950 = vmatpush1.msra.mxu0 %v1052
  %1951 = vmatprep.subr.mxu0 %v1062
  %1952 = vmatpush1.msra.mxu0 %v1061
  %1953 = vmatprep.subr.mxu0 %v1071
  %1954 = vmatpush1.msra.mxu0 %v1070
  %1955 = vmatprep.subr.mxu0 %v1080
  %1956 = vmatpush1.msra.mxu0 %v1079
  %1957 = vmatprep.subr.mxu0 %v1089
  %1958 = vmatpush1.msra.mxu0 %v1088
  %1959 = vmatprep.subr.mxu0 %v1098
  %1960 = vmatpush1.msra.mxu0 %v1097
  %1961 = vmatprep.subr.mxu0 %v1107
  %1962 = vmatpush1.msra.mxu0 %v1106
  %1963 = vmatprep.mubr.f32.mxu0 %v531
  %1964 = vmatmul.mubr.f32.gmra.mrb[0].mxu0 %v530
  %v1965 = vpop.f32.mrb[0].mxu0
  %v1966 = vadd.f32 %v1895, %v1965
  %v1967 = vpop.f32.mrb[0].mxu0
  %v1968 = vadd.f32 %v1897, %v1967
  %1969 = vdwg.mxu0
  %1970 = vmatprep.subr.mxu0 %v1116
  %1971 = vmatpush1.msra.mxu0 %v1115
  %1972 = vmatprep.subr.mxu0 %v1125
  %1973 = vmatpush1.msra.mxu0 %v1124
  %1974 = vmatprep.subr.mxu0 %v1134
  %1975 = vmatpush1.msra.mxu0 %v1133
  %1976 = vmatprep.subr.mxu0 0.0
  %1977 = vmatpush1.msra.mxu0 0.0
  %1978 = vmatprep.subr.mxu0 0.0
  %1979 = vmatpush1.msra.mxu0 0.0
  %1980 = vmatprep.subr.mxu0 0.0
  %1981 = vmatpush1.msra.mxu0 0.0
  %1982 = vmatprep.subr.mxu0 0.0
  %1983 = vmatpush1.msra.mxu0 0.0
  %1984 = vmatprep.subr.mxu0 0.0
  %1985 = vmatpush1.msra.mxu0 0.0
  %1986 = vmatprep.subr.mxu0 0.0
  %1987 = vmatpush1.msra.mxu0 0.0
  %1988 = vmatprep.subr.mxu0 0.0
  %1989 = vmatpush1.msra.mxu0 0.0
  %1990 = vmatprep.subr.mxu0 0.0
  %1991 = vmatpush1.msra.mxu0 0.0
  %1992 = vmatprep.subr.mxu0 0.0
  %1993 = vmatpush1.msra.mxu0 0.0
  %1994 = vmatprep.subr.mxu0 0.0
  %1995 = vmatpush1.msra.mxu0 0.0
  %1996 = vmatprep.subr.mxu0 0.0
  %1997 = vmatpush1.msra.mxu0 0.0
  %1998 = vmatprep.subr.mxu0 0.0
  %1999 = vmatpush1.msra.mxu0 0.0
  %2000 = vmatprep.subr.mxu0 0.0
  %2001 = vmatpush1.msra.mxu0 0.0
  %2002 = vmatprep.subr.mxu0 0.0
  %2003 = vmatpush1.msra.mxu0 0.0
  %2004 = vmatprep.subr.mxu0 0.0
  %2005 = vmatpush1.msra.mxu0 0.0
  %2006 = vmatprep.subr.mxu0 0.0
  %2007 = vmatpush1.msra.mxu0 0.0
  %2008 = vmatprep.subr.mxu0 0.0
  %2009 = vmatpush1.msra.mxu0 0.0
  %2010 = vmatprep.subr.mxu0 0.0
  %2011 = vmatpush1.msra.mxu0 0.0
  %2012 = vmatprep.subr.mxu0 0.0
  %2013 = vmatpush1.msra.mxu0 0.0
  %2014 = vmatprep.subr.mxu0 0.0
  %2015 = vmatpush1.msra.mxu0 0.0
  %2016 = vmatprep.subr.mxu0 0.0
  %2017 = vmatpush1.msra.mxu0 0.0
  %2018 = vmatprep.subr.mxu0 0.0
  %2019 = vmatpush1.msra.mxu0 0.0
  %2020 = vmatprep.subr.mxu0 0.0
  %2021 = vmatpush1.msra.mxu0 0.0
  %2022 = vmatprep.subr.mxu0 0.0
  %2023 = vmatpush1.msra.mxu0 0.0
  %2024 = vmatprep.subr.mxu0 0.0
  %2025 = vmatpush1.msra.mxu0 0.0
  %2026 = vmatprep.subr.mxu0 0.0
  %2027 = vmatpush1.msra.mxu0 0.0
  %2028 = vmatprep.subr.mxu0 0.0
  %2029 = vmatpush1.msra.mxu0 0.0
  %2030 = vmatprep.subr.mxu0 0.0
  %2031 = vmatpush1.msra.mxu0 0.0
  %2032 = vmatprep.subr.mxu0 0.0
  %2033 = vmatpush1.msra.mxu0 0.0
  %2034 = vmatprep.mubr.f32.mxu0 0.0
  %2035 = vmatmul.mubr.f32.gmra.mrb[0].mxu0 %v1187
  %v2036 = vpop.f32.mrb[0].mxu0
  %v2037 = vadd.f32 %v1966, %v2036
  %v2038 = vpop.f32.mrb[0].mxu0
  %v2039 = vadd.f32 %v1968, %v2038
  %2040 = vdwg.mxu0
  %2041 = vmatprep.subr.mxu0 0.0
  %2042 = vmatpush1.msra.mxu0 %v541
  %2043 = vmatprep.subr.mxu0 0.0
  %2044 = vmatpush1.msra.mxu0 %v550
  %2045 = vmatprep.subr.mxu0 0.0
  %2046 = vmatpush1.msra.mxu0 %v559
  %2047 = vmatprep.subr.mxu0 0.0
  %2048 = vmatpush1.msra.mxu0 %v568
  %2049 = vmatprep.subr.mxu0 0.0
  %2050 = vmatpush1.msra.mxu0 %v577
  %2051 = vmatprep.subr.mxu0 0.0
  %2052 = vmatpush1.msra.mxu0 %v586
  %2053 = vmatprep.subr.mxu0 0.0
  %2054 = vmatpush1.msra.mxu0 %v595
  %2055 = vmatprep.subr.mxu0 0.0
  %2056 = vmatpush1.msra.mxu0 %v604
  %2057 = vmatprep.subr.mxu0 0.0
  %2058 = vmatpush1.msra.mxu0 %v613
  %2059 = vmatprep.subr.mxu0 0.0
  %2060 = vmatpush1.msra.mxu0 %v622
  %2061 = vmatprep.subr.mxu0 0.0
  %2062 = vmatpush1.msra.mxu0 %v631
  %2063 = vmatprep.subr.mxu0 0.0
  %2064 = vmatpush1.msra.mxu0 %v640
  %2065 = vmatprep.subr.mxu0 0.0
  %2066 = vmatpush1.msra.mxu0 %v649
  %2067 = vmatprep.subr.mxu0 0.0
  %2068 = vmatpush1.msra.mxu0 %v658
  %2069 = vmatprep.subr.mxu0 0.0
  %2070 = vmatpush1.msra.mxu0 %v667
  %2071 = vmatprep.subr.mxu0 0.0
  %2072 = vmatpush1.msra.mxu0 %v676
  %2073 = vmatprep.subr.mxu0 0.0
  %2074 = vmatpush1.msra.mxu0 %v685
  %2075 = vmatprep.subr.mxu0 0.0
  %2076 = vmatpush1.msra.mxu0 %v694
  %2077 = vmatprep.subr.mxu0 0.0
  %2078 = vmatpush1.msra.mxu0 %v703
  %2079 = vmatprep.subr.mxu0 0.0
  %2080 = vmatpush1.msra.mxu0 %v712
  %2081 = vmatprep.subr.mxu0 0.0
  %2082 = vmatpush1.msra.mxu0 %v721
  %2083 = vmatprep.subr.mxu0 0.0
  %2084 = vmatpush1.msra.mxu0 %v730
  %2085 = vmatprep.subr.mxu0 0.0
  %2086 = vmatpush1.msra.mxu0 %v739
  %2087 = vmatprep.subr.mxu0 0.0
  %2088 = vmatpush1.msra.mxu0 %v748
  %2089 = vmatprep.subr.mxu0 0.0
  %2090 = vmatpush1.msra.mxu0 %v757
  %2091 = vmatprep.subr.mxu0 0.0
  %2092 = vmatpush1.msra.mxu0 %v766
  %2093 = vmatprep.subr.mxu0 0.0
  %2094 = vmatpush1.msra.mxu0 %v775
  %2095 = vmatprep.subr.mxu0 0.0
  %2096 = vmatpush1.msra.mxu0 %v784
  %2097 = vmatprep.subr.mxu0 0.0
  %2098 = vmatpush1.msra.mxu0 %v793
  %2099 = vmatprep.subr.mxu0 0.0
  %2100 = vmatpush1.msra.mxu0 %v802
  %2101 = vmatprep.subr.mxu0 0.0
  %2102 = vmatpush1.msra.mxu0 %v811
  %2103 = vmatprep.subr.mxu0 0.0
  %2104 = vmatpush1.msra.mxu0 %v820
  %2105 = vmatprep.mubr.f32.mxu0 %v529
  %2106 = vmatmul.mubr.f32.gmra.mrb[0].mxu0 %v528
  %v2107 = vpop.f32.mrb[0].mxu0
  %v2108 = vadd.f32 %v1175, %v2107
  %v2109 = vpop.f32.mrb[0].mxu0
  %2110 = vdwg.mxu0
  %2111 = vmatprep.subr.mxu0 0.0
  %2112 = vmatpush1.msra.mxu0 %v829
  %2113 = vmatprep.subr.mxu0 0.0
  %2114 = vmatpush1.msra.mxu0 %v838
  %2115 = vmatprep.subr.mxu0 0.0
  %2116 = vmatpush1.msra.mxu0 %v847
  %2117 = vmatprep.subr.mxu0 0.0
  %2118 = vmatpush1.msra.mxu0 %v856
  %2119 = vmatprep.subr.mxu0 0.0
  %2120 = vmatpush1.msra.mxu0 %v865
  %2121 = vmatprep.subr.mxu0 0.0
  %2122 = vmatpush1.msra.mxu0 %v874
  %2123 = vmatprep.subr.mxu0 0.0
  %2124 = vmatpush1.msra.mxu0 %v883
  %2125 = vmatprep.subr.mxu0 0.0
  %2126 = vmatpush1.msra.mxu0 %v892
  %2127 = vmatprep.subr.mxu0 0.0
  %2128 = vmatpush1.msra.mxu0 %v901
  %2129 = vmatprep.subr.mxu0 0.0
  %2130 = vmatpush1.msra.mxu0 %v910
  %2131 = vmatprep.subr.mxu0 0.0
  %2132 = vmatpush1.msra.mxu0 %v919
  %2133 = vmatprep.subr.mxu0 0.0
  %2134 = vmatpush1.msra.mxu0 %v928
  %2135 = vmatprep.subr.mxu0 0.0
  %2136 = vmatpush1.msra.mxu0 %v937
  %2137 = vmatprep.subr.mxu0 0.0
  %2138 = vmatpush1.msra.mxu0 %v946
  %2139 = vmatprep.subr.mxu0 0.0
  %2140 = vmatpush1.msra.mxu0 %v955
  %2141 = vmatprep.subr.mxu0 0.0
  %2142 = vmatpush1.msra.mxu0 %v964
  %2143 = vmatprep.subr.mxu0 0.0
  %2144 = vmatpush1.msra.mxu0 %v973
  %2145 = vmatprep.subr.mxu0 0.0
  %2146 = vmatpush1.msra.mxu0 %v982
  %2147 = vmatprep.subr.mxu0 0.0
  %2148 = vmatpush1.msra.mxu0 %v991
  %2149 = vmatprep.subr.mxu0 0.0
  %2150 = vmatpush1.msra.mxu0 %v1000
  %2151 = vmatprep.subr.mxu0 0.0
  %2152 = vmatpush1.msra.mxu0 %v1009
  %2153 = vmatprep.subr.mxu0 0.0
  %2154 = vmatpush1.msra.mxu0 %v1018
  %2155 = vmatprep.subr.mxu0 0.0
  %2156 = vmatpush1.msra.mxu0 %v1027
  %2157 = vmatprep.subr.mxu0 0.0
  %2158 = vmatpush1.msra.mxu0 %v1036
  %2159 = vmatprep.subr.mxu0 0.0
  %2160 = vmatpush1.msra.mxu0 %v1045
  %2161 = vmatprep.subr.mxu0 0.0
  %2162 = vmatpush1.msra.mxu0 %v1054
  %2163 = vmatprep.subr.mxu0 0.0
  %2164 = vmatpush1.msra.mxu0 %v1063
  %2165 = vmatprep.subr.mxu0 0.0
  %2166 = vmatpush1.msra.mxu0 %v1072
  %2167 = vmatprep.subr.mxu0 0.0
  %2168 = vmatpush1.msra.mxu0 %v1081
  %2169 = vmatprep.subr.mxu0 0.0
  %2170 = vmatpush1.msra.mxu0 %v1090
  %2171 = vmatprep.subr.mxu0 0.0
  %2172 = vmatpush1.msra.mxu0 %v1099
  %2173 = vmatprep.subr.mxu0 0.0
  %2174 = vmatpush1.msra.mxu0 %v1108
  %2175 = vmatprep.mubr.f32.mxu0 %v531
  %2176 = vmatmul.mubr.f32.gmra.mrb[0].mxu0 %v530
  %v2177 = vpop.f32.mrb[0].mxu0
  %v2178 = vadd.f32 %v2108, %v2177
  %v2179 = vpop.f32.mrb[0].mxu0
  %2180 = vdwg.mxu0
  %2181 = vmatprep.subr.mxu0 0.0
  %2182 = vmatpush1.msra.mxu0 %v1117
  %2183 = vmatprep.subr.mxu0 0.0
  %2184 = vmatpush1.msra.mxu0 %v1126
  %2185 = vmatprep.subr.mxu0 0.0
  %2186 = vmatpush1.msra.mxu0 %v1135
  %2187 = vmatprep.subr.mxu0 0.0
  %2188 = vmatpush1.msra.mxu0 0.0
  %2189 = vmatprep.subr.mxu0 0.0
  %2190 = vmatpush1.msra.mxu0 0.0
  %2191 = vmatprep.subr.mxu0 0.0
  %2192 = vmatpush1.msra.mxu0 0.0
  %2193 = vmatprep.subr.mxu0 0.0
  %2194 = vmatpush1.msra.mxu0 0.0
  %2195 = vmatprep.subr.mxu0 0.0
  %2196 = vmatpush1.msra.mxu0 0.0
  %2197 = vmatprep.subr.mxu0 0.0
  %2198 = vmatpush1.msra.mxu0 0.0
  %2199 = vmatprep.subr.mxu0 0.0
  %2200 = vmatpush1.msra.mxu0 0.0
  %2201 = vmatprep.subr.mxu0 0.0
  %2202 = vmatpush1.msra.mxu0 0.0
  %2203 = vmatprep.subr.mxu0 0.0
  %2204 = vmatpush1.msra.mxu0 0.0
  %2205 = vmatprep.subr.mxu0 0.0
  %2206 = vmatpush1.msra.mxu0 0.0
  %2207 = vmatprep.subr.mxu0 0.0
  %2208 = vmatpush1.msra.mxu0 0.0
  %2209 = vmatprep.subr.mxu0 0.0
  %2210 = vmatpush1.msra.mxu0 0.0
  %2211 = vmatprep.subr.mxu0 0.0
  %2212 = vmatpush1.msra.mxu0 0.0
  %2213 = vmatprep.subr.mxu0 0.0
  %2214 = vmatpush1.msra.mxu0 0.0
  %2215 = vmatprep.subr.mxu0 0.0
  %2216 = vmatpush1.msra.mxu0 0.0
  %2217 = vmatprep.subr.mxu0 0.0
  %2218 = vmatpush1.msra.mxu0 0.0
  %2219 = vmatprep.subr.mxu0 0.0
  %2220 = vmatpush1.msra.mxu0 0.0
  %2221 = vmatprep.subr.mxu0 0.0
  %2222 = vmatpush1.msra.mxu0 0.0
  %2223 = vmatprep.subr.mxu0 0.0
  %2224 = vmatpush1.msra.mxu0 0.0
  %2225 = vmatprep.subr.mxu0 0.0
  %2226 = vmatpush1.msra.mxu0 0.0
  %2227 = vmatprep.subr.mxu0 0.0
  %2228 = vmatpush1.msra.mxu0 0.0
  %2229 = vmatprep.subr.mxu0 0.0
  %2230 = vmatpush1.msra.mxu0 0.0
  %2231 = vmatprep.subr.mxu0 0.0
  %2232 = vmatpush1.msra.mxu0 0.0
  %2233 = vmatprep.subr.mxu0 0.0
  %2234 = vmatpush1.msra.mxu0 0.0
  %2235 = vmatprep.subr.mxu0 0.0
  %2236 = vmatpush1.msra.mxu0 0.0
  %2237 = vmatprep.subr.mxu0 0.0
  %2238 = vmatpush1.msra.mxu0 0.0
  %2239 = vmatprep.subr.mxu0 0.0
  %2240 = vmatpush1.msra.mxu0 0.0
  %2241 = vmatprep.subr.mxu0 0.0
  %2242 = vmatpush1.msra.mxu0 0.0
  %2243 = vmatprep.subr.mxu0 0.0
  %2244 = vmatpush1.msra.mxu0 0.0
  %2245 = vmatprep.mubr.f32.mxu0 0.0
  %2246 = vmatmul.mubr.f32.gmra.mrb[0].mxu0 %v1187
  %v2247 = vpop.f32.mrb[0].mxu0
  %v2248 = vadd.f32 %v2178, %v2247
  %v2249 = vpop.f32.mrb[0].mxu0
  %2250 = vdwg.mxu0
  %v2251 = vsub.f32 0.0, %v1398
  %v2252 = vsub.f32 0.0, %v1400
  %v2253 = vsub.f32 0.0, %v1611
  %v2254 = vsub.f32 0.0, %v1613
  %v2255 = vsub.f32 0.0, %v1824
  %v2256 = vsub.f32 0.0, %v1826
  %v2257 = vsub.f32 0.0, %v2037
  %v2258 = vsub.f32 0.0, %v2039
  %v2259 = vsub.f32 0.0, %v2248
  %v2260 = vmul.f32 %v2251, 1.442695
  %v2261 = vpow.pop %v2260
  %v2262 = vmul.f32 %v2252, 1.442695
  %v2263 = vpow.pop %v2262
  %v2264 = vmul.f32 %v2253, 1.442695
  %v2265 = vpow.pop %v2264
  %v2266 = vmul.f32 %v2254, 1.442695
  %v2267 = vpow.pop %v2266
  %v2268 = vmul.f32 %v2255, 1.442695
  %v2269 = vpow.pop %v2268
  %v2270 = vmul.f32 %v2256, 1.442695
  %v2271 = vpow.pop %v2270
  %v2272 = vmul.f32 %v2257, 1.442695
  %v2273 = vpow.pop %v2272
  %v2274 = vmul.f32 %v2258, 1.442695
  %v2275 = vpow.pop %v2274
  %v2276 = vmul.f32 %v2259, 1.442695
  %v2277 = vpow.pop %v2276
  %v2278 = vadd.f32 %v2261, 1.0
  %v2279 = vadd.f32 %v2263, 1.0
  %v2280 = vadd.f32 %v2265, 1.0
  %v2281 = vadd.f32 %v2267, 1.0
  %v2282 = vadd.f32 %v2269, 1.0
  %v2283 = vadd.f32 %v2271, 1.0
  %v2284 = vadd.f32 %v2273, 1.0
  %v2285 = vadd.f32 %v2275, 1.0
  %v2286 = vadd.f32 %v2277, 1.0
  %v2287 = vrcp.pop %v2278
  %v2288 = vmul.f32 1.0, %v2287
  %v2289 = vrcp.pop %v2279
  %v2290 = vmul.f32 1.0, %v2289
  %v2291 = vrcp.pop %v2280
  %v2292 = vmul.f32 1.0, %v2291
  %v2293 = vrcp.pop %v2281
  %v2294 = vmul.f32 1.0, %v2293
  %v2295 = vrcp.pop %v2282
  %v2296 = vmul.f32 1.0, %v2295
  %v2297 = vrcp.pop %v2283
  %v2298 = vmul.f32 1.0, %v2297
  %v2299 = vrcp.pop %v2284
  %v2300 = vmul.f32 1.0, %v2299
  %v2301 = vrcp.pop %v2285
  %v2302 = vmul.f32 1.0, %v2301
  %v2303 = vrcp.pop %v2286
  %v2304 = vmul.f32 1.0, %v2303
  %v2314 = vcombine.low %v2288, %v2290
  %v2315 = vcombine.low %v2292, %v2294
  %v2317 = vunpack.c.l.s4 1983009808
  %v2318 = vunpack.c.0.s8 %v2317
  %v2319 = vlaneseq
  %v2320 = vshrl.u32 %v2319, 7
  %v2321 = vsub.s32 %v2318, %v2320
  %v2322 = vrot.slane %v2314, %v2321
  %v2324 = vunpack.c.l.s4 1983009808
  %v2325 = vunpack.c.0.s8 %v2324
  %v2326 = vlaneseq
  %v2327 = vshrl.u32 %v2326, 7
  %v2328 = vsub.s32 %v2325, %v2327
  %v2329 = vrot.slane %v2315, %v2328
  %v2330 = vcombine.low %v2322, %v2329
  %v2331 = vcombine.low %v2296, %v2298
  %v2332 = vcombine.low %v2300, %v2302
  %v2334 = vunpack.c.l.s4 1983009808
  %v2335 = vunpack.c.0.s8 %v2334
  %v2336 = vlaneseq
  %v2337 = vshrl.u32 %v2336, 7
  %v2338 = vsub.s32 %v2335, %v2337
  %v2339 = vrot.slane %v2331, %v2338
  %v2341 = vunpack.c.l.s4 1983009808
  %v2342 = vunpack.c.0.s8 %v2341
  %v2343 = vlaneseq
  %v2344 = vshrl.u32 %v2343, 7
  %v2345 = vsub.s32 %v2342, %v2344
  %v2346 = vrot.slane %v2332, %v2345
  %v2347 = vcombine.low %v2339, %v2346
  %v2349 = vunpack.c.l.s4 1983009808
  %v2350 = vunpack.c.0.s8 %v2349
  %v2351 = vlaneseq
  %v2352 = vshrl.u32 %v2351, 7
  %v2353 = vsub.s32 %v2350, %v2352
  %v2354 = vrot.slane %v2304, %v2353
  %2358 = vst [vmem:[%s9] sm:$0xff] %v2330
  %2359 = vst [vmem:[%s9 + $0x8] sm:$0xff] %v2347
  %vm2360 = vcmask 517120
  %2361 = vst.msk [vmem:[%s9 + $0x10] sm:$0x3] %vm2360, %v2354
  // Predicated region
  $region38: #{conv_decoder_forward.1} parent=0 // pred_check
    _
  $region39: #{conv_decoder_forward.1} parent=0 // pred_check_branch
    %2363 = sbr.rel (0) target = $region41
  $region40: #{conv_decoder_forward.1} parent=0 // pred_region
    _
  $region41: #{conv_decoder_forward.1} parent=0 // pred_fallthru
    _
  // Predicated region
  $region42: #{conv_decoder_forward.1} parent=0 // pred_check
    _
  $region43: #{conv_decoder_forward.1} parent=0 // pred_check_branch
    %2365 = sbr.rel (0) target = $region45
  $region44: #{conv_decoder_forward.1} parent=0 // pred_region
    _
  $region45: #{conv_decoder_forward.1} parent=0 // pred_fallthru
    _

</llo_original>
